<compile_context>
chip_gen: v7x
topology: tpu7x:2x2x1
jax: 0.10.0
libtpu: 0.0.40
codegen_flags: <defaults>
</compile_context>

<pallas_src>
import functools

import jax
import jax.numpy as jnp
from jax.experimental import pallas as pl
from jax.experimental.pallas import tpu as pltpu


def _context_block_kernel(
    scalars_ref,                  # SMEM (4,): [prelu_ctx, prelu_mul, prelu_add, b_mask]
    x_ref,                        # VMEM (Bt, C, HW)
    cparams_ref,                  # VMEM (C, 4): [bn_scale, bn_shift, b2_mul, b2_add]
    pparams_ref,                  # VMEM (P, 6): [b1m', ln_g_m, ln_b_m, b1a', ln_g_a, ln_b_a]
    w_mask_ref,                   # (1, C)  conv_mask weight
    w1m_ref, w2m_ref,             # (P, C), (C, P)   channel_mul branch (w1 folded with w_ctx)
    w1a_ref, w2a_ref,             # (P, C), (C, P)   channel_add branch (w1 folded with w_ctx)
    o_ref,                        # VMEM (Bt, C, HW)
    *, compute_dtype,
):
    a_ctx = scalars_ref[0].astype(compute_dtype)
    a_mul = scalars_ref[1]
    a_add = scalars_ref[2]
    b_mask = scalars_ref[3]

    cp = cparams_ref[...]                                  # (C, 4) f32
    bn_scale = cp[:, 0:1].astype(compute_dtype)
    bn_shift = cp[:, 1:2].astype(compute_dtype)
    b2m, b2a = cp[:, 2:3], cp[:, 3:4]

    pp = pparams_ref[...]                                  # (P, 6) f32
    b1m, lng_m, lnb_m = pp[:, 0:1], pp[:, 1:2], pp[:, 2:3]
    b1a, lng_a, lnb_a = pp[:, 3:4], pp[:, 4:5], pp[:, 5:6]

    w_mask = w_mask_ref[...]                               # (1, C), MXU dtype
    w1m, w2m = w1m_ref[...], w2m_ref[...]
    w1a, w2a = w1a_ref[...], w2a_ref[...]
    mxu_dtype = w_mask.dtype

    def branch(w1, b1, lng, lnb, alpha, w2, b2, pooled):
        # Conv1x1(C->P) with the context conv folded in -> LayerNorm([P,1,1]) -> PReLU
        # -> Conv1x1(P->C). All column math stays f32.
        t = jnp.dot(w1, pooled.astype(w1.dtype), preferred_element_type=jnp.float32) + b1
        mu = jnp.mean(t)
        var = jnp.mean(jnp.square(t - mu))
        t = (t - mu) * jax.lax.rsqrt(var + 1e-5) * lng + lnb
        t = jnp.where(t >= 0.0, t, alpha * t)
        return jnp.dot(w2, t.astype(w2.dtype), preferred_element_type=jnp.float32) + b2

    def body(b, carry):
        x = x_ref[b]                                       # (C, HW), native dtype
        xc = x.astype(compute_dtype)

        # ---------------- spatial_pool (pool == 'att') ----------------
        # Pre-conv part of `context`: BatchNorm2d (eval, folded) -> PReLU.
        y = xc * bn_scale + bn_shift
        y = jnp.where(y >= 0.0, y, a_ctx * y)

        # conv_mask logits + softmax over spatial positions (f32 accumulation).
        logits = jnp.dot(w_mask, x.astype(mxu_dtype),
                         preferred_element_type=jnp.float32) + b_mask       # (1, HW)
        m = jnp.max(logits, axis=-1, keepdims=True)
        e = jnp.exp(logits - m)
        inv_sum = 1.0 / jnp.sum(e, axis=-1, keepdims=True)                   # (1, 1)

        # pooled = sum_hw y * softmax (MXU contraction over HW). The 1x1 context conv
        # and its bias are folded into w1/b1 of both branches (exact reorder: softmax
        # weights sum to 1, Dropout is identity, BN already folded).
        pooled = jnp.einsum('cn,on->co', y.astype(mxu_dtype), e.astype(mxu_dtype),
                            preferred_element_type=jnp.float32) * inv_sum    # (C, 1)

        # --------------- channel transform branches -------------------
        mul_term = branch(w1m, b1m, lng_m, lnb_m, a_mul, w2m, b2m, pooled)
        add_term = branch(w1a, b1a, lng_a, lnb_a, a_add, w2a, b2a, pooled)

        out = xc * jax.nn.sigmoid(mul_term).astype(compute_dtype) \
            + add_term.astype(compute_dtype)
        o_ref[b] = out.astype(o_ref.dtype)
        return carry

    bt = x_ref.shape[0]
    if bt == 1:
        body(0, None)
    else:
        # Bounded code size / live ranges for large Bt; fully unrolled when small.
        jax.lax.fori_loop(0, bt, body, None, unroll=bool(bt <= 8))


def _round_up(x, m):
    return ((x + m - 1) // m) * m


def _chip_caps():
    """(vmem_capacity_bytes, has_bf16_valu, two_tensorcores) with safe fallbacks."""
    kind = ""
    try:
        kind = jax.devices()[0].device_kind.lower()
    except Exception:
        pass
    try:
        vmem = int(pltpu.get_tpu_info().vmem_capacity_bytes)
    except Exception:
        vmem = (64 << 20) if "v7" in kind else (128 << 20)
    bf16_valu = ("v6" in kind) or ("v7" in kind)
    two_tc = "v7" in kind
    return vmem, bf16_valu, two_tc


def _pick_batch_tile(B, C, HW, itemsize, target_bytes, two_tc):
    """Batches per grid step: amortize per-step overhead within the per-chip target."""
    bytes_per_batch = 2 * _round_up(C, 16) * _round_up(HW, 128) * itemsize   # in + out slab
    bt = max(1, min(B, target_bytes // max(bytes_per_batch, 1)))
    if two_tc:                                   # keep both v7x TensorCores busy
        while bt > 1 and (B // bt) < 2:
            bt -= 1
    while B % bt != 0:                           # bt must divide B
        bt -= 1
    return int(bt)


@jax.jit
def context_block_2d(x_nchw, params):
    B, C, H, W = x_nchw.shape
    HW = H * W
    x = x_nchw.reshape(B, C, HW)                 # contiguous -> free

    vmem_cap, bf16_valu, two_tc = _chip_caps()
    in_is_bf16 = (x.dtype == jnp.bfloat16)
    mxu_dtype = jnp.bfloat16 if in_is_bf16 else jnp.float32
    compute_dtype = jnp.bfloat16 if (in_is_bf16 and bf16_valu) else jnp.float32

    # Fold the 1x1 context conv (w_ctx, b_ctx) into the branch weights: exact linear fold.
    w_ctx = params["w_ctx"].astype(jnp.float32)
    b_ctx = params["b_ctx"].astype(jnp.float32)
    w1m_f = params["w1m"].astype(jnp.float32) @ w_ctx
    b1m_f = params["w1m"].astype(jnp.float32) @ b_ctx + params["b1m"]
    w1a_f = params["w1a"].astype(jnp.float32) @ w_ctx
    b1a_f = params["w1a"].astype(jnp.float32) @ b_ctx + params["b1a"]

    # Pack per-channel / per-plane column vectors into two dense f32 arrays.
    cparams = jnp.concatenate(
        [params["bn_scale"], params["bn_shift"], params["b2m"], params["b2a"]],
        axis=1).astype(jnp.float32)                                          # (C, 4)
    pparams = jnp.concatenate(
        [b1m_f, params["lng_m"], params["lnb_m"],
         b1a_f, params["lng_a"], params["lnb_a"]], axis=1).astype(jnp.float32)  # (P, 6)
    scalars = jnp.stack(
        [params["prelu_ctx"][0, 0], params["prelu_m"][0, 0],
         params["prelu_a"][0, 0], params["b_mask"][0, 0]]).astype(jnp.float32)  # (4,)

    weights = [params["w_mask"].astype(mxu_dtype),
               w1m_f.astype(mxu_dtype), params["w2m"].astype(mxu_dtype),
               w1a_f.astype(mxu_dtype), params["w2a"].astype(mxu_dtype)]

    if vmem_cap >= (96 << 20):        # v5e / v6e: 128 MiB VMEM -> big slabs
        target, cap = 24 << 20, 100 << 20
    else:                             # v7x: 64 MiB VMEM -> conservative
        target, cap = 8 << 20, 48 << 20
    # TODO(synk): very large C*HW (a single-batch slab above `target`) needs an HW-tiled
    # two-pass variant (online-softmax pool pass + apply pass) to fit v7x's 64 MiB VMEM.

    Bt = _pick_batch_tile(B, C, HW, x.dtype.itemsize, target, two_tc)
    grid = (B // Bt,)

    in_specs = [
        pl.BlockSpec(memory_space=pltpu.MemorySpace.SMEM),               # scalars
        pl.BlockSpec((Bt, C, HW), lambda b: (b, 0, 0)),                  # x
        pl.BlockSpec(cparams.shape, lambda b: (0, 0)),
        pl.BlockSpec(pparams.shape, lambda b: (0, 0)),
    ] + [pl.BlockSpec(w.shape, lambda b: (0, 0)) for w in weights]

    # VMEM budget derived from actual (lane/sublane-padded) block sizes; no fixed floor.
    slab = Bt * _round_up(C, 16) * _round_up(HW, 128) * x.dtype.itemsize
    param_bytes = sum(int(a.size) * a.dtype.itemsize for a in [cparams, pparams] + weights)
    inter = 6 * _round_up(C, 16) * _round_up(HW, 128) * 4   # in-kernel per-batch intermediates
    est = 4 * slab + 2 * param_bytes + inter + (8 << 20)
    vmem_limit = int(min(est, cap))

    kernel = functools.partial(_context_block_kernel, compute_dtype=compute_dtype)

    out = pl.pallas_call(
        kernel,
        out_shape=jax.ShapeDtypeStruct((B, C, HW), x.dtype),
        grid_spec=pltpu.PrefetchScalarGridSpec(
            num_scalar_prefetch=0,
            grid=grid,
            in_specs=in_specs,
            out_specs=pl.BlockSpec((Bt, C, HW), lambda b: (b, 0, 0)),
        ),
        compiler_params=pltpu.CompilerParams(
            dimension_semantics=("parallel",),
            vmem_limit_bytes=vmem_limit,
        ),
    )(scalars, x, cparams, pparams, *weights)

    return out.reshape(B, C, H, W)


def ref_forward(x_nchw, params):
    """Pure-JAX reference mirroring the PyTorch forward (eval mode), unfolded."""
    B, C, H, W = x_nchw.shape
    x = x_nchw.reshape(B, C, H * W).astype(jnp.float32)
    y = x * params["bn_scale"][None] + params["bn_shift"][None]
    a = params["prelu_ctx"][0, 0]
    y = jnp.where(y >= 0, y, a * y)
    input_x = jnp.einsum("ck,bkn->bcn", params["w_ctx"], y) + params["b_ctx"][None]
    logits = jnp.einsum("oc,bcn->bon", params["w_mask"], x) + params["b_mask"][0, 0]
    p = jax.nn.softmax(logits, axis=-1)
    ctx = jnp.sum(input_x * p, axis=-1, keepdims=True)                   # (B, C, 1)

    def branch(sfx):
        t = jnp.einsum("pc,bcn->bpn", params["w1" + sfx], ctx) + params["b1" + sfx][None]
        mu = jnp.mean(t, axis=1, keepdims=True)
        var = jnp.mean((t - mu) ** 2, axis=1, keepdims=True)
        t = (t - mu) / jnp.sqrt(var + 1e-5) * params["lng_" + sfx][None] + params["lnb_" + sfx][None]
        al = params["prelu_" + sfx][0, 0]
        t = jnp.where(t >= 0, t, al * t)
        return jnp.einsum("cp,bpn->bcn", params["w2" + sfx], t) + params["b2" + sfx][None]

    out = x * jax.nn.sigmoid(branch("m")) + branch("a")
    return out.reshape(B, C, H, W)


def make_params(key, inplanes, planes):
    C, P = inplanes, planes
    ks = jax.random.split(key, 24)
    f32 = jnp.float32

    gamma = 1.0 + 0.1 * jax.random.normal(ks[0], (C, 1), f32)
    beta = 0.1 * jax.random.normal(ks[1], (C, 1), f32)
    running_mean = 0.1 * jax.random.normal(ks[2], (C, 1), f32)
    running_var = 1.0 + 0.1 * jax.random.uniform(ks[3], (C, 1), f32)
    bn_scale = gamma / jnp.sqrt(running_var + 1e-5)
    bn_shift = beta - running_mean * bn_scale

    def w(k, shape, scale=0.2):
        return scale * jax.random.normal(k, shape, f32)

    return {
        "bn_scale": bn_scale,
        "bn_shift": bn_shift,
        "prelu_ctx": jnp.full((1, 1), 0.25, f32),
        "w_ctx": w(ks[4], (C, C)),
        "b_ctx": w(ks[5], (C, 1), 0.05),
        "w_mask": w(ks[6], (1, C)),
        "b_mask": w(ks[7], (1, 1), 0.05),
        # channel_mul branch
        "w1m": w(ks[8], (P, C)),
        "b1m": w(ks[9], (P, 1), 0.05),
        "lng_m": 1.0 + 0.1 * jax.random.normal(ks[10], (P, 1), f32),
        "lnb_m": 0.1 * jax.random.normal(ks[11], (P, 1), f32),
        "prelu_m": jnp.full((1, 1), 0.25, f32),
        "w2m": w(ks[12], (C, P)),
        "b2m": w(ks[13], (C, 1), 0.05),
        # channel_add branch
        "w1a": w(ks[14], (P, C)),
        "b1a": w(ks[15], (P, 1), 0.05),
        "lng_a": 1.0 + 0.1 * jax.random.normal(ks[16], (P, 1), f32),
        "lnb_a": 0.1 * jax.random.normal(ks[17], (P, 1), f32),
        "prelu_a": jnp.full((1, 1), 0.25, f32),
        "w2a": w(ks[18], (C, P)),
        "b2a": w(ks[19], (C, 1), 0.05),
    }


if __name__ == "__main__":
    key = jax.random.PRNGKey(0)

    # Case 1: HW multiple of 128, small batch (f32).
    # Case 2: ragged HW=144 (no XLA pad/slice; Mosaic masks the lane tail), multi-batch tile.
    # Case 3: bf16 input exercises the bf16 MXU path (+ bf16 elementwise on v6e/v7x).
    cases = [
        (2, 8, 4, 16, 16, jnp.float32),    # B, C(inplanes), P(planes), H, W, dtype
        (4, 16, 8, 12, 12, jnp.float32),
        (2, 16, 8, 12, 12, jnp.bfloat16),
    ]

    for i, (B, C, P, H, W, dt) in enumerate(cases):
        k_x, k_p = jax.random.split(jax.random.fold_in(key, i))
        x_f32 = jax.random.normal(k_x, (B, C, H, W), jnp.float32)
        params = make_params(k_p, C, P)

        out = jax.block_until_ready(context_block_2d(x_f32.astype(dt), params))
        ref = ref_forward(x_f32, params)

        assert out.shape == (B, C, H, W)
        assert out.dtype == dt
        tol = 1e-4 if dt == jnp.float32 else 1e-1   # bf16 MXU operands -> looser tolerance
        out32 = out.astype(jnp.float32)
        err = jnp.max(jnp.abs(out32 - ref))
        assert jnp.allclose(out32, ref, rtol=tol, atol=tol), (
            f"case {i}: max abs err = {err}")

    print("KERNEL_OK")
</pallas_src>

<mosaic_0001>
module attributes {stable_mosaic.version = 11 : i64} {
  func.func @_context_block_kernel(%arg0: i32, %arg1: memref<4xf32, #tpu.memory_space<smem>>, %arg2: memref<2x8x256xf32, #tpu.memory_space<vmem>>, %arg3: memref<8x4xf32, #tpu.memory_space<vmem>>, %arg4: memref<4x6xf32, #tpu.memory_space<vmem>>, %arg5: memref<1x8xf32, #tpu.memory_space<vmem>>, %arg6: memref<4x8xf32, #tpu.memory_space<vmem>>, %arg7: memref<8x4xf32, #tpu.memory_space<vmem>>, %arg8: memref<4x8xf32, #tpu.memory_space<vmem>>, %arg9: memref<8x4xf32, #tpu.memory_space<vmem>>, %arg10: memref<2x8x256xf32, #tpu.memory_space<vmem>>) attributes {dimension_semantics = [#tpu.dimension_semantics<parallel>], iteration_bounds = array<i64: 1>, scalar_prefetch = 0 : i64, scratch_operands = 0 : i64, tpu.core_type = #tpu.core_type<tc>, window_params = [{transform_indices = @transform_0, window_bounds = array<i64: 4>}, {transform_indices = @transform_1, window_bounds = array<i64: 2, 8, 256>}, {pipeline_mode = #tpu.pipeline_mode<synchronous>, transform_indices = @transform_2, window_bounds = array<i64: 8, 4>}, {pipeline_mode = #tpu.pipeline_mode<synchronous>, transform_indices = @transform_3, window_bounds = array<i64: 4, 6>}, {pipeline_mode = #tpu.pipeline_mode<synchronous>, transform_indices = @transform_4, window_bounds = array<i64: 1, 8>}, {pipeline_mode = #tpu.pipeline_mode<synchronous>, transform_indices = @transform_5, window_bounds = array<i64: 4, 8>}, {pipeline_mode = #tpu.pipeline_mode<synchronous>, transform_indices = @transform_6, window_bounds = array<i64: 8, 4>}, {pipeline_mode = #tpu.pipeline_mode<synchronous>, transform_indices = @transform_7, window_bounds = array<i64: 4, 8>}, {pipeline_mode = #tpu.pipeline_mode<synchronous>, transform_indices = @transform_8, window_bounds = array<i64: 8, 4>}, {transform_indices = @transform_9, window_bounds = array<i64: 2, 8, 256>}]} {
    %c0 = arith.constant 0 : index
    %0 = memref.load %arg1[%c0] : memref<4xf32, #tpu.memory_space<smem>>
    %c1 = arith.constant 1 : index
    %1 = memref.load %arg1[%c1] : memref<4xf32, #tpu.memory_space<smem>>
    %c2 = arith.constant 2 : index
    %2 = memref.load %arg1[%c2] : memref<4xf32, #tpu.memory_space<smem>>
    %c3 = arith.constant 3 : index
    %3 = memref.load %arg1[%c3] : memref<4xf32, #tpu.memory_space<smem>>
    %c0_0 = arith.constant 0 : index
    %c0_1 = arith.constant 0 : index
    %4 = vector.load %arg3[%c0_0, %c0_1] : memref<8x4xf32, #tpu.memory_space<vmem>>, vector<8x4xf32>
    %5 = vector.extract_strided_slice %4 {offsets = [0, 0], sizes = [8, 1], strides = [1, 1]} : vector<8x4xf32> to vector<8x1xf32>
    %6 = vector.extract_strided_slice %4 {offsets = [0, 1], sizes = [8, 1], strides = [1, 1]} : vector<8x4xf32> to vector<8x1xf32>
    %7 = vector.extract_strided_slice %4 {offsets = [0, 2], sizes = [8, 1], strides = [1, 1]} : vector<8x4xf32> to vector<8x1xf32>
    %8 = vector.extract_strided_slice %4 {offsets = [0, 3], sizes = [8, 1], strides = [1, 1]} : vector<8x4xf32> to vector<8x1xf32>
    %c0_2 = arith.constant 0 : index
    %c0_3 = arith.constant 0 : index
    %9 = vector.load %arg4[%c0_2, %c0_3] : memref<4x6xf32, #tpu.memory_space<vmem>>, vector<4x6xf32>
    %10 = vector.extract_strided_slice %9 {offsets = [0, 0], sizes = [4, 1], strides = [1, 1]} : vector<4x6xf32> to vector<4x1xf32>
    %11 = vector.extract_strided_slice %9 {offsets = [0, 1], sizes = [4, 1], strides = [1, 1]} : vector<4x6xf32> to vector<4x1xf32>
    %12 = vector.extract_strided_slice %9 {offsets = [0, 2], sizes = [4, 1], strides = [1, 1]} : vector<4x6xf32> to vector<4x1xf32>
    %13 = vector.extract_strided_slice %9 {offsets = [0, 3], sizes = [4, 1], strides = [1, 1]} : vector<4x6xf32> to vector<4x1xf32>
    %14 = vector.extract_strided_slice %9 {offsets = [0, 4], sizes = [4, 1], strides = [1, 1]} : vector<4x6xf32> to vector<4x1xf32>
    %15 = vector.extract_strided_slice %9 {offsets = [0, 5], sizes = [4, 1], strides = [1, 1]} : vector<4x6xf32> to vector<4x1xf32>
    %c0_4 = arith.constant 0 : index
    %c0_5 = arith.constant 0 : index
    %16 = vector.load %arg5[%c0_4, %c0_5] : memref<1x8xf32, #tpu.memory_space<vmem>>, vector<1x8xf32>
    %c0_6 = arith.constant 0 : index
    %c0_7 = arith.constant 0 : index
    %17 = vector.load %arg6[%c0_6, %c0_7] : memref<4x8xf32, #tpu.memory_space<vmem>>, vector<4x8xf32>
    %c0_8 = arith.constant 0 : index
    %c0_9 = arith.constant 0 : index
    %18 = vector.load %arg7[%c0_8, %c0_9] : memref<8x4xf32, #tpu.memory_space<vmem>>, vector<8x4xf32>
    %c0_10 = arith.constant 0 : index
    %c0_11 = arith.constant 0 : index
    %19 = vector.load %arg8[%c0_10, %c0_11] : memref<4x8xf32, #tpu.memory_space<vmem>>, vector<4x8xf32>
    %c0_12 = arith.constant 0 : index
    %c0_13 = arith.constant 0 : index
    %20 = vector.load %arg9[%c0_12, %c0_13] : memref<8x4xf32, #tpu.memory_space<vmem>>, vector<8x4xf32>
    %c0_i32 = arith.constant 0 : i32
    %21 = arith.index_cast %c0_i32 : i32 to index
    %c0_14 = arith.constant 0 : index
    %c0_15 = arith.constant 0 : index
    %22 = vector.load %arg2[%21, %c0_14, %c0_15] : memref<2x8x256xf32, #tpu.memory_space<vmem>>, vector<1x8x256xf32>
    %23 = vector.shape_cast %22 : vector<1x8x256xf32> to vector<8x256xf32>
    %24 = vector.broadcast %5 : vector<8x1xf32> to vector<8x256xf32>
    %25 = arith.mulf %23, %24 : vector<8x256xf32>
    %26 = vector.broadcast %6 : vector<8x1xf32> to vector<8x256xf32>
    %27 = arith.addf %25, %26 : vector<8x256xf32>
    %cst = arith.constant 0.000000e+00 : f32
    %28 = vector.broadcast %cst : f32 to vector<8x256xf32>
    %29 = arith.cmpf oge, %27, %28 : vector<8x256xf32>
    %30 = vector.broadcast %0 : f32 to vector<8x256xf32>
    %31 = arith.mulf %30, %27 : vector<8x256xf32>
    %32 = arith.select %29, %27, %31 : vector<8x256xi1>, vector<8x256xf32>
    %cst_16 = arith.constant dense<0.000000e+00> : vector<1x256xf32>
    %33 = tpu.matmul %16, %23, %cst_16 {dimension_numbers = #tpu.dot_dimension_numbers<[1], [0], [0], [1], [0, 0, 1, 1], [], []>} : vector<1x8xf32>, vector<8x256xf32>, vector<1x256xf32> -> vector<1x256xf32>
    %34 = vector.broadcast %3 : f32 to vector<1x256xf32>
    %35 = arith.addf %33, %34 : vector<1x256xf32>
    %cst_17 = arith.constant dense<0xFF800000> : vector<1xf32>
    %36 = vector.multi_reduction <maximumf>, %35, %cst_17 [1] : vector<1x256xf32> to vector<1xf32>
    %37 = vector.shape_cast %36 : vector<1xf32> to vector<1x1xf32>
    %38 = vector.broadcast %37 : vector<1x1xf32> to vector<1x256xf32>
    %39 = arith.subf %35, %38 : vector<1x256xf32>
    %40 = math.exp %39 : vector<1x256xf32>
    %cst_18 = arith.constant dense<0.000000e+00> : vector<1xf32>
    %41 = vector.multi_reduction <add>, %40, %cst_18 [1] : vector<1x256xf32> to vector<1xf32>
    %42 = vector.shape_cast %41 : vector<1xf32> to vector<1x1xf32>
    %cst_19 = arith.constant 1.000000e+00 : f32
    %43 = vector.broadcast %cst_19 : f32 to vector<1x1xf32>
    %44 = arith.divf %43, %42 : vector<1x1xf32>
    "tpu.trace_start"() <{level = 10 : i32, message = "cn,on->co"}> : () -> ()
    %cst_20 = arith.constant dense<0.000000e+00> : vector<8x1xf32>
    %45 = tpu.matmul %32, %40, %cst_20 {dimension_numbers = #tpu.dot_dimension_numbers<[1], [1], [0], [0], [0, 0, 1, 0], [], []>} : vector<8x256xf32>, vector<1x256xf32>, vector<8x1xf32> -> vector<8x1xf32>
    "tpu.trace_stop"() : () -> ()
    %46 = vector.broadcast %44 : vector<1x1xf32> to vector<8x1xf32>
    %47 = arith.mulf %45, %46 : vector<8x1xf32>
    %cst_21 = arith.constant dense<0.000000e+00> : vector<4x1xf32>
    %48 = tpu.matmul %17, %47, %cst_21 {dimension_numbers = #tpu.dot_dimension_numbers<[1], [0], [0], [1], [0, 0, 1, 1], [], []>} : vector<4x8xf32>, vector<8x1xf32>, vector<4x1xf32> -> vector<4x1xf32>
    %49 = arith.addf %48, %10 : vector<4x1xf32>
    %50 = vector.shape_cast %49 : vector<4x1xf32> to vector<1x4x1xf32>
    %cst_22 = arith.constant dense<0.000000e+00> : vector<1xf32>
    %51 = vector.multi_reduction <add>, %50, %cst_22 [1, 2] : vector<1x4x1xf32> to vector<1xf32>
    %52 = vector.shape_cast %51 : vector<1xf32> to vector<1x1x1xf32>
    %53 = vector.extract %52[0, 0, 0] : f32 from vector<1x1x1xf32>
    %cst_23 = arith.constant 4.000000e+00 : f32
    %54 = arith.divf %53, %cst_23 : f32
    %55 = vector.broadcast %54 : f32 to vector<4x1xf32>
    %56 = arith.subf %49, %55 : vector<4x1xf32>
    %57 = arith.mulf %56, %56 : vector<4x1xf32>
    %58 = vector.shape_cast %57 : vector<4x1xf32> to vector<1x4x1xf32>
    %cst_24 = arith.constant dense<0.000000e+00> : vector<1xf32>
    %59 = vector.multi_reduction <add>, %58, %cst_24 [1, 2] : vector<1x4x1xf32> to vector<1xf32>
    %60 = vector.shape_cast %59 : vector<1xf32> to vector<1x1x1xf32>
    %61 = vector.extract %60[0, 0, 0] : f32 from vector<1x1x1xf32>
    %cst_25 = arith.constant 4.000000e+00 : f32
    %62 = arith.divf %61, %cst_25 : f32
    %63 = vector.broadcast %54 : f32 to vector<4x1xf32>
    %64 = arith.subf %49, %63 : vector<4x1xf32>
    %cst_26 = arith.constant 9.99999974E-6 : f32
    %65 = arith.addf %62, %cst_26 : f32
    %66 = math.rsqrt %65 : f32
    %67 = vector.broadcast %66 : f32 to vector<4x1xf32>
    %68 = arith.mulf %64, %67 : vector<4x1xf32>
    %69 = arith.mulf %68, %11 : vector<4x1xf32>
    %70 = arith.addf %69, %12 : vector<4x1xf32>
    %cst_27 = arith.constant 0.000000e+00 : f32
    %71 = vector.broadcast %cst_27 : f32 to vector<4x1xf32>
    %72 = arith.cmpf oge, %70, %71 : vector<4x1xf32>
    %73 = vector.broadcast %1 : f32 to vector<4x1xf32>
    %74 = arith.mulf %73, %70 : vector<4x1xf32>
    %75 = arith.select %72, %70, %74 : vector<4x1xi1>, vector<4x1xf32>
    %cst_28 = arith.constant dense<0.000000e+00> : vector<8x1xf32>
    %76 = tpu.matmul %18, %75, %cst_28 {dimension_numbers = #tpu.dot_dimension_numbers<[1], [0], [0], [1], [0, 0, 1, 1], [], []>} : vector<8x4xf32>, vector<4x1xf32>, vector<8x1xf32> -> vector<8x1xf32>
    %77 = arith.addf %76, %7 : vector<8x1xf32>
    %cst_29 = arith.constant dense<0.000000e+00> : vector<4x1xf32>
    %78 = tpu.matmul %19, %47, %cst_29 {dimension_numbers = #tpu.dot_dimension_numbers<[1], [0], [0], [1], [0, 0, 1, 1], [], []>} : vector<4x8xf32>, vector<8x1xf32>, vector<4x1xf32> -> vector<4x1xf32>
    %79 = arith.addf %78, %13 : vector<4x1xf32>
    %80 = vector.shape_cast %79 : vector<4x1xf32> to vector<1x4x1xf32>
    %cst_30 = arith.constant dense<0.000000e+00> : vector<1xf32>
    %81 = vector.multi_reduction <add>, %80, %cst_30 [1, 2] : vector<1x4x1xf32> to vector<1xf32>
    %82 = vector.shape_cast %81 : vector<1xf32> to vector<1x1x1xf32>
    %83 = vector.extract %82[0, 0, 0] : f32 from vector<1x1x1xf32>
    %cst_31 = arith.constant 4.000000e+00 : f32
    %84 = arith.divf %83, %cst_31 : f32
    %85 = vector.broadcast %84 : f32 to vector<4x1xf32>
    %86 = arith.subf %79, %85 : vector<4x1xf32>
    %87 = arith.mulf %86, %86 : vector<4x1xf32>
    %88 = vector.shape_cast %87 : vector<4x1xf32> to vector<1x4x1xf32>
    %cst_32 = arith.constant dense<0.000000e+00> : vector<1xf32>
    %89 = vector.multi_reduction <add>, %88, %cst_32 [1, 2] : vector<1x4x1xf32> to vector<1xf32>
    %90 = vector.shape_cast %89 : vector<1xf32> to vector<1x1x1xf32>
    %91 = vector.extract %90[0, 0, 0] : f32 from vector<1x1x1xf32>
    %cst_33 = arith.constant 4.000000e+00 : f32
    %92 = arith.divf %91, %cst_33 : f32
    %93 = vector.broadcast %84 : f32 to vector<4x1xf32>
    %94 = arith.subf %79, %93 : vector<4x1xf32>
    %cst_34 = arith.constant 9.99999974E-6 : f32
    %95 = arith.addf %92, %cst_34 : f32
    %96 = math.rsqrt %95 : f32
    %97 = vector.broadcast %96 : f32 to vector<4x1xf32>
    %98 = arith.mulf %94, %97 : vector<4x1xf32>
    %99 = arith.mulf %98, %14 : vector<4x1xf32>
    %100 = arith.addf %99, %15 : vector<4x1xf32>
    %cst_35 = arith.constant 0.000000e+00 : f32
    %101 = vector.broadcast %cst_35 : f32 to vector<4x1xf32>
    %102 = arith.cmpf oge, %100, %101 : vector<4x1xf32>
    %103 = vector.broadcast %2 : f32 to vector<4x1xf32>
    %104 = arith.mulf %103, %100 : vector<4x1xf32>
    %105 = arith.select %102, %100, %104 : vector<4x1xi1>, vector<4x1xf32>
    %cst_36 = arith.constant dense<0.000000e+00> : vector<8x1xf32>
    %106 = tpu.matmul %20, %105, %cst_36 {dimension_numbers = #tpu.dot_dimension_numbers<[1], [0], [0], [1], [0, 0, 1, 1], [], []>} : vector<8x4xf32>, vector<4x1xf32>, vector<8x1xf32> -> vector<8x1xf32>
    %107 = arith.addf %106, %8 : vector<8x1xf32>
    %108 = arith.negf %77 : vector<8x1xf32>
    %109 = math.exp %108 : vector<8x1xf32>
    %cst_37 = arith.constant 1.000000e+00 : f32
    %110 = vector.broadcast %cst_37 : f32 to vector<8x1xf32>
    %111 = arith.addf %110, %109 : vector<8x1xf32>
    %112 = arith.divf %110, %111 : vector<8x1xf32>
    %113 = vector.broadcast %112 : vector<8x1xf32> to vector<8x256xf32>
    %114 = arith.mulf %23, %113 : vector<8x256xf32>
    %115 = vector.broadcast %107 : vector<8x1xf32> to vector<8x256xf32>
    %116 = arith.addf %114, %115 : vector<8x256xf32>
    %117 = arith.index_cast %c0_i32 : i32 to index
    %c0_38 = arith.constant 0 : index
    %c0_39 = arith.constant 0 : index
    %118 = vector.load %arg10[%117, %c0_38, %c0_39] : memref<2x8x256xf32, #tpu.memory_space<vmem>>, vector<1x8x256xf32>
    %119 = vector.shape_cast %118 : vector<1x8x256xf32> to vector<8x256xf32>
    %120 = vector.shape_cast %116 : vector<8x256xf32> to vector<1x8x256xf32>
    tpu.vector_store %arg10[%117, %c0_38, %c0_39], %120 {strides = array<i32>} : memref<2x8x256xf32, #tpu.memory_space<vmem>>, vector<1x8x256xf32>,
    %c1_i32 = arith.constant 1 : i32
    %121 = arith.index_cast %c1_i32 : i32 to index
    %c0_40 = arith.constant 0 : index
    %c0_41 = arith.constant 0 : index
    %122 = vector.load %arg2[%121, %c0_40, %c0_41] : memref<2x8x256xf32, #tpu.memory_space<vmem>>, vector<1x8x256xf32>
    %123 = vector.shape_cast %122 : vector<1x8x256xf32> to vector<8x256xf32>
    %124 = vector.broadcast %5 : vector<8x1xf32> to vector<8x256xf32>
    %125 = arith.mulf %123, %124 : vector<8x256xf32>
    %126 = vector.broadcast %6 : vector<8x1xf32> to vector<8x256xf32>
    %127 = arith.addf %125, %126 : vector<8x256xf32>
    %cst_42 = arith.constant 0.000000e+00 : f32
    %128 = vector.broadcast %cst_42 : f32 to vector<8x256xf32>
    %129 = arith.cmpf oge, %127, %128 : vector<8x256xf32>
    %130 = vector.broadcast %0 : f32 to vector<8x256xf32>
    %131 = arith.mulf %130, %127 : vector<8x256xf32>
    %132 = arith.select %129, %127, %131 : vector<8x256xi1>, vector<8x256xf32>
    %cst_43 = arith.constant dense<0.000000e+00> : vector<1x256xf32>
    %133 = tpu.matmul %16, %123, %cst_43 {dimension_numbers = #tpu.dot_dimension_numbers<[1], [0], [0], [1], [0, 0, 1, 1], [], []>} : vector<1x8xf32>, vector<8x256xf32>, vector<1x256xf32> -> vector<1x256xf32>
    %134 = vector.broadcast %3 : f32 to vector<1x256xf32>
    %135 = arith.addf %133, %134 : vector<1x256xf32>
    %cst_44 = arith.constant dense<0xFF800000> : vector<1xf32>
    %136 = vector.multi_reduction <maximumf>, %135, %cst_44 [1] : vector<1x256xf32> to vector<1xf32>
    %137 = vector.shape_cast %136 : vector<1xf32> to vector<1x1xf32>
    %138 = vector.broadcast %137 : vector<1x1xf32> to vector<1x256xf32>
    %139 = arith.subf %135, %138 : vector<1x256xf32>
    %140 = math.exp %139 : vector<1x256xf32>
    %cst_45 = arith.constant dense<0.000000e+00> : vector<1xf32>
    %141 = vector.multi_reduction <add>, %140, %cst_45 [1] : vector<1x256xf32> to vector<1xf32>
    %142 = vector.shape_cast %141 : vector<1xf32> to vector<1x1xf32>
    %cst_46 = arith.constant 1.000000e+00 : f32
    %143 = vector.broadcast %cst_46 : f32 to vector<1x1xf32>
    %144 = arith.divf %143, %142 : vector<1x1xf32>
    "tpu.trace_start"() <{level = 10 : i32, message = "cn,on->co"}> : () -> ()
    %cst_47 = arith.constant dense<0.000000e+00> : vector<8x1xf32>
    %145 = tpu.matmul %132, %140, %cst_47 {dimension_numbers = #tpu.dot_dimension_numbers<[1], [1], [0], [0], [0, 0, 1, 0], [], []>} : vector<8x256xf32>, vector<1x256xf32>, vector<8x1xf32> -> vector<8x1xf32>
    "tpu.trace_stop"() : () -> ()
    %146 = vector.broadcast %144 : vector<1x1xf32> to vector<8x1xf32>
    %147 = arith.mulf %145, %146 : vector<8x1xf32>
    %cst_48 = arith.constant dense<0.000000e+00> : vector<4x1xf32>
    %148 = tpu.matmul %17, %147, %cst_48 {dimension_numbers = #tpu.dot_dimension_numbers<[1], [0], [0], [1], [0, 0, 1, 1], [], []>} : vector<4x8xf32>, vector<8x1xf32>, vector<4x1xf32> -> vector<4x1xf32>
    %149 = arith.addf %148, %10 : vector<4x1xf32>
    %150 = vector.shape_cast %149 : vector<4x1xf32> to vector<1x4x1xf32>
    %cst_49 = arith.constant dense<0.000000e+00> : vector<1xf32>
    %151 = vector.multi_reduction <add>, %150, %cst_49 [1, 2] : vector<1x4x1xf32> to vector<1xf32>
    %152 = vector.shape_cast %151 : vector<1xf32> to vector<1x1x1xf32>
    %153 = vector.extract %152[0, 0, 0] : f32 from vector<1x1x1xf32>
    %cst_50 = arith.constant 4.000000e+00 : f32
    %154 = arith.divf %153, %cst_50 : f32
    %155 = vector.broadcast %154 : f32 to vector<4x1xf32>
    %156 = arith.subf %149, %155 : vector<4x1xf32>
    %157 = arith.mulf %156, %156 : vector<4x1xf32>
    %158 = vector.shape_cast %157 : vector<4x1xf32> to vector<1x4x1xf32>
    %cst_51 = arith.constant dense<0.000000e+00> : vector<1xf32>
    %159 = vector.multi_reduction <add>, %158, %cst_51 [1, 2] : vector<1x4x1xf32> to vector<1xf32>
    %160 = vector.shape_cast %159 : vector<1xf32> to vector<1x1x1xf32>
    %161 = vector.extract %160[0, 0, 0] : f32 from vector<1x1x1xf32>
    %cst_52 = arith.constant 4.000000e+00 : f32
    %162 = arith.divf %161, %cst_52 : f32
    %163 = vector.broadcast %154 : f32 to vector<4x1xf32>
    %164 = arith.subf %149, %163 : vector<4x1xf32>
    %cst_53 = arith.constant 9.99999974E-6 : f32
    %165 = arith.addf %162, %cst_53 : f32
    %166 = math.rsqrt %165 : f32
    %167 = vector.broadcast %166 : f32 to vector<4x1xf32>
    %168 = arith.mulf %164, %167 : vector<4x1xf32>
    %169 = arith.mulf %168, %11 : vector<4x1xf32>
    %170 = arith.addf %169, %12 : vector<4x1xf32>
    %cst_54 = arith.constant 0.000000e+00 : f32
    %171 = vector.broadcast %cst_54 : f32 to vector<4x1xf32>
    %172 = arith.cmpf oge, %170, %171 : vector<4x1xf32>
    %173 = vector.broadcast %1 : f32 to vector<4x1xf32>
    %174 = arith.mulf %173, %170 : vector<4x1xf32>
    %175 = arith.select %172, %170, %174 : vector<4x1xi1>, vector<4x1xf32>
    %cst_55 = arith.constant dense<0.000000e+00> : vector<8x1xf32>
    %176 = tpu.matmul %18, %175, %cst_55 {dimension_numbers = #tpu.dot_dimension_numbers<[1], [0], [0], [1], [0, 0, 1, 1], [], []>} : vector<8x4xf32>, vector<4x1xf32>, vector<8x1xf32> -> vector<8x1xf32>
    %177 = arith.addf %176, %7 : vector<8x1xf32>
    %cst_56 = arith.constant dense<0.000000e+00> : vector<4x1xf32>
    %178 = tpu.matmul %19, %147, %cst_56 {dimension_numbers = #tpu.dot_dimension_numbers<[1], [0], [0], [1], [0, 0, 1, 1], [], []>} : vector<4x8xf32>, vector<8x1xf32>, vector<4x1xf32> -> vector<4x1xf32>
    %179 = arith.addf %178, %13 : vector<4x1xf32>
    %180 = vector.shape_cast %179 : vector<4x1xf32> to vector<1x4x1xf32>
    %cst_57 = arith.constant dense<0.000000e+00> : vector<1xf32>
    %181 = vector.multi_reduction <add>, %180, %cst_57 [1, 2] : vector<1x4x1xf32> to vector<1xf32>
    %182 = vector.shape_cast %181 : vector<1xf32> to vector<1x1x1xf32>
    %183 = vector.extract %182[0, 0, 0] : f32 from vector<1x1x1xf32>
    %cst_58 = arith.constant 4.000000e+00 : f32
    %184 = arith.divf %183, %cst_58 : f32
    %185 = vector.broadcast %184 : f32 to vector<4x1xf32>
    %186 = arith.subf %179, %185 : vector<4x1xf32>
    %187 = arith.mulf %186, %186 : vector<4x1xf32>
    %188 = vector.shape_cast %187 : vector<4x1xf32> to vector<1x4x1xf32>
    %cst_59 = arith.constant dense<0.000000e+00> : vector<1xf32>
    %189 = vector.multi_reduction <add>, %188, %cst_59 [1, 2] : vector<1x4x1xf32> to vector<1xf32>
    %190 = vector.shape_cast %189 : vector<1xf32> to vector<1x1x1xf32>
    %191 = vector.extract %190[0, 0, 0] : f32 from vector<1x1x1xf32>
    %cst_60 = arith.constant 4.000000e+00 : f32
    %192 = arith.divf %191, %cst_60 : f32
    %193 = vector.broadcast %184 : f32 to vector<4x1xf32>
    %194 = arith.subf %179, %193 : vector<4x1xf32>
    %cst_61 = arith.constant 9.99999974E-6 : f32
    %195 = arith.addf %192, %cst_61 : f32
    %196 = math.rsqrt %195 : f32
    %197 = vector.broadcast %196 : f32 to vector<4x1xf32>
    %198 = arith.mulf %194, %197 : vector<4x1xf32>
    %199 = arith.mulf %198, %14 : vector<4x1xf32>
    %200 = arith.addf %199, %15 : vector<4x1xf32>
    %cst_62 = arith.constant 0.000000e+00 : f32
    %201 = vector.broadcast %cst_62 : f32 to vector<4x1xf32>
    %202 = arith.cmpf oge, %200, %201 : vector<4x1xf32>
    %203 = vector.broadcast %2 : f32 to vector<4x1xf32>
    %204 = arith.mulf %203, %200 : vector<4x1xf32>
    %205 = arith.select %202, %200, %204 : vector<4x1xi1>, vector<4x1xf32>
    %cst_63 = arith.constant dense<0.000000e+00> : vector<8x1xf32>
    %206 = tpu.matmul %20, %205, %cst_63 {dimension_numbers = #tpu.dot_dimension_numbers<[1], [0], [0], [1], [0, 0, 1, 1], [], []>} : vector<8x4xf32>, vector<4x1xf32>, vector<8x1xf32> -> vector<8x1xf32>
    %207 = arith.addf %206, %8 : vector<8x1xf32>
    %208 = arith.negf %177 : vector<8x1xf32>
    %209 = math.exp %208 : vector<8x1xf32>
    %cst_64 = arith.constant 1.000000e+00 : f32
    %210 = vector.broadcast %cst_64 : f32 to vector<8x1xf32>
    %211 = arith.addf %210, %209 : vector<8x1xf32>
    %212 = arith.divf %210, %211 : vector<8x1xf32>
    %213 = vector.broadcast %212 : vector<8x1xf32> to vector<8x256xf32>
    %214 = arith.mulf %123, %213 : vector<8x256xf32>
    %215 = vector.broadcast %207 : vector<8x1xf32> to vector<8x256xf32>
    %216 = arith.addf %214, %215 : vector<8x256xf32>
    %217 = arith.index_cast %c1_i32 : i32 to index
    %c0_65 = arith.constant 0 : index
    %c0_66 = arith.constant 0 : index
    %218 = vector.load %arg10[%217, %c0_65, %c0_66] : memref<2x8x256xf32, #tpu.memory_space<vmem>>, vector<1x8x256xf32>
    %219 = vector.shape_cast %218 : vector<1x8x256xf32> to vector<8x256xf32>
    %220 = vector.shape_cast %216 : vector<8x256xf32> to vector<1x8x256xf32>
    tpu.vector_store %arg10[%217, %c0_65, %c0_66], %220 {strides = array<i32>} : memref<2x8x256xf32, #tpu.memory_space<vmem>>, vector<1x8x256xf32>,
    %c2_i32 = arith.constant 2 : i32
    return
  }
  func.func @transform_0(%arg0: i32) -> i32 {
    %c0_i32 = arith.constant 0 : i32
    %c0_i32_0 = arith.constant 0 : i32
    return %c0_i32 : i32
  }
  func.func @transform_1(%arg0: i32) -> (i32, i32, i32) {
    %c0_i32 = arith.constant 0 : i32
    %c0_i32_0 = arith.constant 0 : i32
    %c0_i32_1 = arith.constant 0 : i32
    return %arg0, %c0_i32, %c0_i32_0 : i32, i32, i32
  }
  func.func @transform_2(%arg0: i32) -> (i32, i32) {
    %c0_i32 = arith.constant 0 : i32
    %c0_i32_0 = arith.constant 0 : i32
    %c0_i32_1 = arith.constant 0 : i32
    return %c0_i32, %c0_i32_0 : i32, i32
  }
  func.func @transform_3(%arg0: i32) -> (i32, i32) {
    %c0_i32 = arith.constant 0 : i32
    %c0_i32_0 = arith.constant 0 : i32
    %c0_i32_1 = arith.constant 0 : i32
    return %c0_i32, %c0_i32_0 : i32, i32
  }
  func.func @transform_4(%arg0: i32) -> (i32, i32) {
    %c0_i32 = arith.constant 0 : i32
    %c0_i32_0 = arith.constant 0 : i32
    %c0_i32_1 = arith.constant 0 : i32
    return %c0_i32, %c0_i32_0 : i32, i32
  }
  func.func @transform_5(%arg0: i32) -> (i32, i32) {
    %c0_i32 = arith.constant 0 : i32
    %c0_i32_0 = arith.constant 0 : i32
    %c0_i32_1 = arith.constant 0 : i32
    return %c0_i32, %c0_i32_0 : i32, i32
  }
  func.func @transform_6(%arg0: i32) -> (i32, i32) {
    %c0_i32 = arith.constant 0 : i32
    %c0_i32_0 = arith.constant 0 : i32
    %c0_i32_1 = arith.constant 0 : i32
    return %c0_i32, %c0_i32_0 : i32, i32
  }
  func.func @transform_7(%arg0: i32) -> (i32, i32) {
    %c0_i32 = arith.constant 0 : i32
    %c0_i32_0 = arith.constant 0 : i32
    %c0_i32_1 = arith.constant 0 : i32
    return %c0_i32, %c0_i32_0 : i32, i32
  }
  func.func @transform_8(%arg0: i32) -> (i32, i32) {
    %c0_i32 = arith.constant 0 : i32
    %c0_i32_0 = arith.constant 0 : i32
    %c0_i32_1 = arith.constant 0 : i32
    return %c0_i32, %c0_i32_0 : i32, i32
  }
  func.func @transform_9(%arg0: i32) -> (i32, i32, i32) {
    %c0_i32 = arith.constant 0 : i32
    %c0_i32_0 = arith.constant 0 : i32
    %c0_i32_1 = arith.constant 0 : i32
    return %arg0, %c0_i32, %c0_i32_0 : i32, i32, i32
  }
}

</mosaic_0001>

<llo_original>
// kernel: context_block_2d.1
$region0: #{context_block_2d.1}
  #allocation0 [shape = 'u32[]', space=smem, size = 0x4, offset = 0x4, fixed_abs, tag = 'smem constant byte address 0x4 - core index']
  #allocation1 [shape = 'u32[144,128]{1,0:T(1,128)}', space=vmem, size = 0x12000, scoped, tag = 'internal scratch']
  %s0 = inlined_call_operand.vmem [shape: f32[4], index: 0, kind: input, shape index: {}]
  %s1 = inlined_call_operand.vmem [shape: f32[2,8,256], index: 1, kind: input, shape index: {}]
  %s2 = inlined_call_operand.vmem [shape: f32[8,4], index: 2, kind: input, shape index: {}]
  %s3 = inlined_call_operand.vmem [shape: f32[4,6], index: 3, kind: input, shape index: {}]
  %s4 = inlined_call_operand.vmem [shape: f32[1,8], index: 4, kind: input, shape index: {}]
  %s5 = inlined_call_operand.vmem [shape: f32[4,8], index: 5, kind: input, shape index: {}]
  %s6 = inlined_call_operand.vmem [shape: f32[8,4], index: 6, kind: input, shape index: {}]
  %s7 = inlined_call_operand.vmem [shape: f32[4,8], index: 7, kind: input, shape index: {}]
  %s8 = inlined_call_operand.vmem [shape: f32[8,4], index: 8, kind: input, shape index: {}]
  %s9 = inlined_call_operand.vmem [shape: f32[2,8,256], index: 9, kind: output, shape index: {}]
  %s10 = sld [smem:[#allocation0]]
  $region50: #{context_block_2d.1} parent=0
    _
  %s12 = ssub.s32 1, %s10
  %s13 = scalar_select 0, %s12, %s10
  $region1: #{context_block_2d.1} parent=0
    #allocation2 [shape = 'u8[512]{0}', space=smem, size = 0x200, scoped, tag = 'input window, operand 0, single buffered']
    #allocation3 [shape = 's32[1]{0}', space=sflag, size = 0x4, scoped, tag = 'scoped memory for context_block_2d.1']
    %14 = vsyncpa [#allocation3], 0
    // Predicated region
    $region2: #{context_block_2d.1} parent=1 // pred_check
      _
    $region3: #{context_block_2d.1} parent=1 // pred_check_branch
      %16 = sbr.rel (0) target = $region5
    $region4: #{context_block_2d.1} parent=1 // pred_region
      %s18 = ssub.s32 16, 16
      %19 = vsyncadd [#allocation3], %s18
      %s21 = sshll.u32 %s0, 4
      %s22 = int_to_ptr.vmem [resolvable:$true] %s21
      %24 = dma.vmem_to_smem %s22, 16, [#allocation2], [#allocation3]
    $region5: #{context_block_2d.1} parent=1 // pred_fallthru
      _
    // Predicated region
    $region6: #{context_block_2d.1} parent=1 // pred_check
      _
    $region7: #{context_block_2d.1} parent=1 // pred_check_branch
      %26 = sbr.rel (0) target = $region9
    $region8: #{context_block_2d.1} parent=1 // pred_region
      _
    $region9: #{context_block_2d.1} parent=1 // pred_fallthru
      _
    // Predicated region
    $region10: #{context_block_2d.1} parent=1 // pred_check
      _
    $region11: #{context_block_2d.1} parent=1 // pred_check_branch
      %28 = sbr.rel (0) target = $region13
    $region12: #{context_block_2d.1} parent=1 // pred_region
      _
    $region13: #{context_block_2d.1} parent=1 // pred_fallthru
      _
    // Predicated region
    $region14: #{context_block_2d.1} parent=1 // pred_check
      _
    $region15: #{context_block_2d.1} parent=1 // pred_check_branch
      %30 = sbr.rel (0) target = $region17
    $region16: #{context_block_2d.1} parent=1 // pred_region
      _
    $region17: #{context_block_2d.1} parent=1 // pred_fallthru
      _
    // Predicated region
    $region18: #{context_block_2d.1} parent=1 // pred_check
      _
    $region19: #{context_block_2d.1} parent=1 // pred_check_branch
      %32 = sbr.rel (0) target = $region21
    $region20: #{context_block_2d.1} parent=1 // pred_region
      _
    $region21: #{context_block_2d.1} parent=1 // pred_fallthru
      _
    // Predicated region
    $region22: #{context_block_2d.1} parent=1 // pred_check
      _
    $region23: #{context_block_2d.1} parent=1 // pred_check_branch
      %34 = sbr.rel (0) target = $region25
    $region24: #{context_block_2d.1} parent=1 // pred_region
      _
    $region25: #{context_block_2d.1} parent=1 // pred_fallthru
      _
    // Predicated region
    $region26: #{context_block_2d.1} parent=1 // pred_check
      _
    $region27: #{context_block_2d.1} parent=1 // pred_check_branch
      %36 = sbr.rel (0) target = $region29
    $region28: #{context_block_2d.1} parent=1 // pred_region
      _
    $region29: #{context_block_2d.1} parent=1 // pred_fallthru
      _
    // Predicated region
    $region30: #{context_block_2d.1} parent=1 // pred_check
      _
    $region31: #{context_block_2d.1} parent=1 // pred_check_branch
      %38 = sbr.rel (0) target = $region33
    $region32: #{context_block_2d.1} parent=1 // pred_region
      _
    $region33: #{context_block_2d.1} parent=1 // pred_fallthru
      _
    // Predicated region
    $region34: #{context_block_2d.1} parent=1 // pred_check
      _
    $region35: #{context_block_2d.1} parent=1 // pred_check_branch
      %40 = sbr.rel (0) target = $region37
    $region36: #{context_block_2d.1} parent=1 // pred_region
      _
    $region37: #{context_block_2d.1} parent=1 // pred_fallthru
      _
    // Predicated region
    $region38: #{context_block_2d.1} parent=1 // pred_check
      _
    $region39: #{context_block_2d.1} parent=1 // pred_check_branch
      %42 = sbr.rel (0) target = $region41
    $region40: #{context_block_2d.1} parent=1 // pred_region
      %43 = dma.done [#allocation3], 16
    $region41: #{context_block_2d.1} parent=1 // pred_fallthru
      _
    %44 = sfence
    %s45 = sld [smem:[#allocation2]]
    %s46 = sld [smem:[#allocation2 + $0x1]]
    %s47 = sld [smem:[#allocation2 + $0x2]]
    %s48 = sld [smem:[#allocation2 + $0x3]]
    %v49 = vld [vmem:[%s2] sm:$0xff]
    %v50 = vld [vmem:[%s3] sm:$0xf]
    %v51 = vld [vmem:[%s4] sm:$0x1]
    %v52 = vld [vmem:[%s5] sm:$0xf]
    %v53 = vld [vmem:[%s6] sm:$0xff]
    %v54 = vld [vmem:[%s7] sm:$0xf]
    %v55 = vld [vmem:[%s8] sm:$0xff]
    %v56 = vld [vmem:[%s1] sm:$0xff]
    %v57 = vld [vmem:[%s1 + $0x8] sm:$0xff]
    %59 = vset.pattern.permute.xlu0 0
    %60 = vperm.xlu0 %59, %v49
    %v61 = vpop.permute.xlu0 %60
    %v63 = vmul.f32 %v56, %v61
    %v64 = vmul.f32 %v57, %v61
    %65 = vset.pattern.permute.xlu0 1
    %66 = vperm.xlu0 %65, %v49
    %v67 = vpop.permute.xlu0 %66
    %v69 = vadd.f32 %v63, %v67
    %v70 = vadd.f32 %v64, %v67
    %vm71 = vcmp.ge.f32.partialorder %v69, 0.0
    %vm72 = vcmp.ge.f32.partialorder %v70, 0.0
    %v73 = vstv %s45
    %v74 = vmul.f32 %v73, %v69
    %v75 = vmul.f32 %v73, %v70
    %v76 = vsel %vm71, %v69, %v74
    %v77 = vsel %vm72, %v70, %v75
    %v78 = vstv %s48
    %vm79 = vcmask 64512
    %v81 = vsel %vm79, %v51, 0
    %83 = vmatprep.subr.mxu0 %v57
    %84 = vmatpush1.msra.mxu0 %v56
    %85 = vmatprep.subr.mxu0 0.0
    %86 = vmatpush1.msra.mxu0 0.0
    %87 = vmatprep.subr.mxu0 0.0
    %88 = vmatpush1.msra.mxu0 0.0
    %89 = vmatprep.subr.mxu0 0.0
    %90 = vmatpush1.msra.mxu0 0.0
    %91 = vmatprep.subr.mxu0 0.0
    %92 = vmatpush1.msra.mxu0 0.0
    %93 = vmatprep.subr.mxu0 0.0
    %94 = vmatpush1.msra.mxu0 0.0
    %95 = vmatprep.subr.mxu0 0.0
    %96 = vmatpush1.msra.mxu0 0.0
    %97 = vmatprep.subr.mxu0 0.0
    %98 = vmatpush1.msra.mxu0 0.0
    %99 = vmatprep.subr.mxu0 0.0
    %100 = vmatpush1.msra.mxu0 0.0
    %101 = vmatprep.subr.mxu0 0.0
    %102 = vmatpush1.msra.mxu0 0.0
    %103 = vmatprep.subr.mxu0 0.0
    %104 = vmatpush1.msra.mxu0 0.0
    %105 = vmatprep.subr.mxu0 0.0
    %106 = vmatpush1.msra.mxu0 0.0
    %107 = vmatprep.subr.mxu0 0.0
    %108 = vmatpush1.msra.mxu0 0.0
    %109 = vmatprep.subr.mxu0 0.0
    %110 = vmatpush1.msra.mxu0 0.0
    %111 = vmatprep.subr.mxu0 0.0
    %112 = vmatpush1.msra.mxu0 0.0
    %113 = vmatprep.subr.mxu0 0.0
    %114 = vmatpush1.msra.mxu0 0.0
    %115 = vmatprep.subr.mxu0 0.0
    %116 = vmatpush1.msra.mxu0 0.0
    %117 = vmatprep.subr.mxu0 0.0
    %118 = vmatpush1.msra.mxu0 0.0
    %119 = vmatprep.subr.mxu0 0.0
    %120 = vmatpush1.msra.mxu0 0.0
    %121 = vmatprep.subr.mxu0 0.0
    %122 = vmatpush1.msra.mxu0 0.0
    %123 = vmatprep.subr.mxu0 0.0
    %124 = vmatpush1.msra.mxu0 0.0
    %125 = vmatprep.subr.mxu0 0.0
    %126 = vmatpush1.msra.mxu0 0.0
    %127 = vmatprep.subr.mxu0 0.0
    %128 = vmatpush1.msra.mxu0 0.0
    %129 = vmatprep.subr.mxu0 0.0
    %130 = vmatpush1.msra.mxu0 0.0
    %131 = vmatprep.subr.mxu0 0.0
    %132 = vmatpush1.msra.mxu0 0.0
    %133 = vmatprep.subr.mxu0 0.0
    %134 = vmatpush1.msra.mxu0 0.0
    %135 = vmatprep.subr.mxu0 0.0
    %136 = vmatpush1.msra.mxu0 0.0
    %137 = vmatprep.subr.mxu0 0.0
    %138 = vmatpush1.msra.mxu0 0.0
    %139 = vmatprep.subr.mxu0 0.0
    %140 = vmatpush1.msra.mxu0 0.0
    %141 = vmatprep.subr.mxu0 0.0
    %142 = vmatpush1.msra.mxu0 0.0
    %143 = vmatprep.subr.mxu0 0.0
    %144 = vmatpush1.msra.mxu0 0.0
    %145 = vmatprep.subr.mxu0 0.0
    %146 = vmatpush1.msra.mxu0 0.0
    %147 = vmatprep.mubr.f32.mxu0 0.0
    %148 = vmatmul.mubr.f32.gmra.mrb[0].mxu0 %v81
    %v149 = vpop.f32.mrb[0].mxu0
    %v150 = vadd.f32 %v78, %v149
    %v151 = vpop.f32.mrb[0].mxu0
    %v152 = vadd.f32 %v78, %v151
    %153 = vdwg.mxu0
    %vm154 = vcmask 1040384
    %v155 = vsel %vm154, %v150, -inf
    %v156 = vsel %vm154, %v152, -inf
    %v157 = vmax.f32 %v155, %v156
    %158 = vmax.xlane.f32.xlu0 %v157
    %v159 = vpop.xlane.xlu0 %158
    %v160 = vsub.f32 %v150, %v159
    %v161 = vsub.f32 %v152, %v159
    %v162 = vmul.f32 %v160, 1.442695
    %v163 = vpow.pop %v162
    %v164 = vmul.f32 %v161, 1.442695
    %v165 = vpow.pop %v164
    %v166 = vsel %vm154, %v163, 0.0
    %v167 = vsel %vm154, %v165, 0.0
    %v168 = vadd.f32 %v166, %v167
    %169 = vadd.xlane.f32.xlu0 %v168
    %v170 = vpop.xlane.xlu0 %169
    %v171 = vrcp.pop %v170
    %v172 = vmul.f32 1.0, %v171
    %v173 = vlaneseq
    %v174 = vshrl.u32 %v173, 7
    %v175 = vsub.s32 0, %v174
    %v176 = vrot.slane %v163, %v175
    %v177 = vlaneseq
    %v178 = vshrl.u32 %v177, 7
    %v179 = vsub.s32 0, %v178
    %v180 = vrot.slane %v165, %v179
    %v181 = vmul.f32 %v76, %v176
    %v182 = vmul.f32 %v77, %v180
    %v183 = vadd.f32 %v181, %v182
    %184 = vadd.xlane.f32.xlu0 %v183
    %v185 = vpop.xlane.xlu0 %184
    %v186 = vlaneseq
    %v187 = vshrl.u32 %v186, 7
    %v188 = vsub.s32 0, %v187
    %v189 = vrot.slane %v172, %v188
    %v190 = vmul.f32 %v185, %v189
    %v192 = vsel %vm79, %v52, 0
    %194 = vmatprep.subr.mxu0 0.0
    %195 = vmatpush1.msra.mxu0 %v190
    %196 = vmatprep.subr.mxu0 0.0
    %197 = vmatpush1.msra.mxu0 0.0
    %198 = vmatprep.subr.mxu0 0.0
    %199 = vmatpush1.msra.mxu0 0.0
    %200 = vmatprep.subr.mxu0 0.0
    %201 = vmatpush1.msra.mxu0 0.0
    %202 = vmatprep.subr.mxu0 0.0
    %203 = vmatpush1.msra.mxu0 0.0
    %204 = vmatprep.subr.mxu0 0.0
    %205 = vmatpush1.msra.mxu0 0.0
    %206 = vmatprep.subr.mxu0 0.0
    %207 = vmatpush1.msra.mxu0 0.0
    %208 = vmatprep.subr.mxu0 0.0
    %209 = vmatpush1.msra.mxu0 0.0
    %210 = vmatprep.subr.mxu0 0.0
    %211 = vmatpush1.msra.mxu0 0.0
    %212 = vmatprep.subr.mxu0 0.0
    %213 = vmatpush1.msra.mxu0 0.0
    %214 = vmatprep.subr.mxu0 0.0
    %215 = vmatpush1.msra.mxu0 0.0
    %216 = vmatprep.subr.mxu0 0.0
    %217 = vmatpush1.msra.mxu0 0.0
    %218 = vmatprep.subr.mxu0 0.0
    %219 = vmatpush1.msra.mxu0 0.0
    %220 = vmatprep.subr.mxu0 0.0
    %221 = vmatpush1.msra.mxu0 0.0
    %222 = vmatprep.subr.mxu0 0.0
    %223 = vmatpush1.msra.mxu0 0.0
    %224 = vmatprep.subr.mxu0 0.0
    %225 = vmatpush1.msra.mxu0 0.0
    %226 = vmatprep.subr.mxu0 0.0
    %227 = vmatpush1.msra.mxu0 0.0
    %228 = vmatprep.subr.mxu0 0.0
    %229 = vmatpush1.msra.mxu0 0.0
    %230 = vmatprep.subr.mxu0 0.0
    %231 = vmatpush1.msra.mxu0 0.0
    %232 = vmatprep.subr.mxu0 0.0
    %233 = vmatpush1.msra.mxu0 0.0
    %234 = vmatprep.subr.mxu0 0.0
    %235 = vmatpush1.msra.mxu0 0.0
    %236 = vmatprep.subr.mxu0 0.0
    %237 = vmatpush1.msra.mxu0 0.0
    %238 = vmatprep.subr.mxu0 0.0
    %239 = vmatpush1.msra.mxu0 0.0
    %240 = vmatprep.subr.mxu0 0.0
    %241 = vmatpush1.msra.mxu0 0.0
    %242 = vmatprep.subr.mxu0 0.0
    %243 = vmatpush1.msra.mxu0 0.0
    %244 = vmatprep.subr.mxu0 0.0
    %245 = vmatpush1.msra.mxu0 0.0
    %246 = vmatprep.subr.mxu0 0.0
    %247 = vmatpush1.msra.mxu0 0.0
    %248 = vmatprep.subr.mxu0 0.0
    %249 = vmatpush1.msra.mxu0 0.0
    %250 = vmatprep.subr.mxu0 0.0
    %251 = vmatpush1.msra.mxu0 0.0
    %252 = vmatprep.subr.mxu0 0.0
    %253 = vmatpush1.msra.mxu0 0.0
    %254 = vmatprep.subr.mxu0 0.0
    %255 = vmatpush1.msra.mxu0 0.0
    %256 = vmatprep.subr.mxu0 0.0
    %257 = vmatpush1.msra.mxu0 0.0
    %258 = vmatprep.mubr.f32.mxu0 0.0
    %259 = vmatmul.mubr.f32.gmra.mrb[0].mxu0 %v192
    %v260 = vpop.f32.mrb[0].mxu0
    %v261 = vadd.f32 %v50, %v260
    %v262 = vpop.f32.mrb[0].mxu0
    %263 = vdwg.mxu0
    %vm264 = vcmask 3072
    %v265 = vsel %vm264, %v261, 0.0
    %266 = vadd.xlane.f32.xlu0 %v265
    %v267 = vpop.xlane.xlu0 %266
    %v268 = vrot.slane %v267, 4
    %v269 = vadd.f32 %v267, %v268
    %v270 = vrot.slane %v269, 2
    %v271 = vadd.f32 %v269, %v270
    %v272 = vrot.slane %v271, 1
    %v273 = vadd.f32 %v271, %v272
    %s274 = vtos %v273
    %v275 = vrcp.pop 4.0
    %s276 = vtos %v275
    %s277 = smul.f32 %s274, %s276
    %v278 = vstv %s277
    %v279 = vsub.f32 %v261, %v278
    %v280 = vmul.f32 %v279, %v279
    %v281 = vsel %vm264, %v280, 0.0
    %282 = vadd.xlane.f32.xlu0 %v281
    %v283 = vpop.xlane.xlu0 %282
    %v284 = vrot.slane %v283, 4
    %v285 = vadd.f32 %v283, %v284
    %v286 = vrot.slane %v285, 2
    %v287 = vadd.f32 %v285, %v286
    %v288 = vrot.slane %v287, 1
    %v289 = vadd.f32 %v287, %v288
    %s290 = vtos %v289
    %v291 = vrcp.pop 4.0
    %s292 = vtos %v291
    %s293 = smul.f32 %s290, %s292
    %s294 = sadd.f32 %s293, 1e-05
    %v295 = vstv %s294
    %v296 = vrsqrt.pop %v295
    %s297 = vtos %v296
    %v298 = vstv %s297
    %v299 = vmul.f32 %v279, %v298
    %301 = vrot.lane.b32.xlu0 %v50, 127
    %v302 = vpop.permute.xlu0 %301
    %v304 = vmul.f32 %v299, %v302
    %305 = vrot.lane.b32.xlu0 %v50, 126
    %v306 = vpop.permute.xlu0 %305
    %v308 = vadd.f32 %v304, %v306
    %vm309 = vcmp.ge.f32.partialorder %v308, 0.0
    %v310 = vstv %s46
    %v311 = vmul.f32 %v310, %v308
    %v312 = vsel %vm309, %v308, %v311
    %313 = vrot.lane.b32.xlu0 %v49, 126
    %v314 = vpop.permute.xlu0 %313
    %vm316 = vcmask 31744
    %v318 = vsel %vm316, %v53, 0
    %vm320 = vcmask 1043456
    %v322 = vsel %vm320, %v312, 0
    %324 = vmatprep.subr.mxu0 0.0
    %325 = vmatpush1.msra.mxu0 %v322
    %326 = vmatprep.subr.mxu0 0.0
    %327 = vmatpush1.msra.mxu0 0.0
    %328 = vmatprep.subr.mxu0 0.0
    %329 = vmatpush1.msra.mxu0 0.0
    %330 = vmatprep.subr.mxu0 0.0
    %331 = vmatpush1.msra.mxu0 0.0
    %332 = vmatprep.subr.mxu0 0.0
    %333 = vmatpush1.msra.mxu0 0.0
    %334 = vmatprep.subr.mxu0 0.0
    %335 = vmatpush1.msra.mxu0 0.0
    %336 = vmatprep.subr.mxu0 0.0
    %337 = vmatpush1.msra.mxu0 0.0
    %338 = vmatprep.subr.mxu0 0.0
    %339 = vmatpush1.msra.mxu0 0.0
    %340 = vmatprep.subr.mxu0 0.0
    %341 = vmatpush1.msra.mxu0 0.0
    %342 = vmatprep.subr.mxu0 0.0
    %343 = vmatpush1.msra.mxu0 0.0
    %344 = vmatprep.subr.mxu0 0.0
    %345 = vmatpush1.msra.mxu0 0.0
    %346 = vmatprep.subr.mxu0 0.0
    %347 = vmatpush1.msra.mxu0 0.0
    %348 = vmatprep.subr.mxu0 0.0
    %349 = vmatpush1.msra.mxu0 0.0
    %350 = vmatprep.subr.mxu0 0.0
    %351 = vmatpush1.msra.mxu0 0.0
    %352 = vmatprep.subr.mxu0 0.0
    %353 = vmatpush1.msra.mxu0 0.0
    %354 = vmatprep.subr.mxu0 0.0
    %355 = vmatpush1.msra.mxu0 0.0
    %356 = vmatprep.subr.mxu0 0.0
    %357 = vmatpush1.msra.mxu0 0.0
    %358 = vmatprep.subr.mxu0 0.0
    %359 = vmatpush1.msra.mxu0 0.0
    %360 = vmatprep.subr.mxu0 0.0
    %361 = vmatpush1.msra.mxu0 0.0
    %362 = vmatprep.subr.mxu0 0.0
    %363 = vmatpush1.msra.mxu0 0.0
    %364 = vmatprep.subr.mxu0 0.0
    %365 = vmatpush1.msra.mxu0 0.0
    %366 = vmatprep.subr.mxu0 0.0
    %367 = vmatpush1.msra.mxu0 0.0
    %368 = vmatprep.subr.mxu0 0.0
    %369 = vmatpush1.msra.mxu0 0.0
    %370 = vmatprep.subr.mxu0 0.0
    %371 = vmatpush1.msra.mxu0 0.0
    %372 = vmatprep.subr.mxu0 0.0
    %373 = vmatpush1.msra.mxu0 0.0
    %374 = vmatprep.subr.mxu0 0.0
    %375 = vmatpush1.msra.mxu0 0.0
    %376 = vmatprep.subr.mxu0 0.0
    %377 = vmatpush1.msra.mxu0 0.0
    %378 = vmatprep.subr.mxu0 0.0
    %379 = vmatpush1.msra.mxu0 0.0
    %380 = vmatprep.subr.mxu0 0.0
    %381 = vmatpush1.msra.mxu0 0.0
    %382 = vmatprep.subr.mxu0 0.0
    %383 = vmatpush1.msra.mxu0 0.0
    %384 = vmatprep.subr.mxu0 0.0
    %385 = vmatpush1.msra.mxu0 0.0
    %386 = vmatprep.subr.mxu0 0.0
    %387 = vmatpush1.msra.mxu0 0.0
    %388 = vmatprep.mubr.f32.mxu0 0.0
    %389 = vmatmul.mubr.f32.gmra.mrb[0].mxu0 %v318
    %v390 = vpop.f32.mrb[0].mxu0
    %v391 = vadd.f32 %v314, %v390
    %v392 = vpop.f32.mrb[0].mxu0
    %393 = vdwg.mxu0
    %394 = vrot.lane.b32.xlu0 %v50, 125
    %v395 = vpop.permute.xlu0 %394
    %v398 = vsel %vm79, %v54, 0
    %400 = vmatprep.subr.mxu0 0.0
    %401 = vmatpush1.msra.mxu0 %v190
    %402 = vmatprep.subr.mxu0 0.0
    %403 = vmatpush1.msra.mxu0 0.0
    %404 = vmatprep.subr.mxu0 0.0
    %405 = vmatpush1.msra.mxu0 0.0
    %406 = vmatprep.subr.mxu0 0.0
    %407 = vmatpush1.msra.mxu0 0.0
    %408 = vmatprep.subr.mxu0 0.0
    %409 = vmatpush1.msra.mxu0 0.0
    %410 = vmatprep.subr.mxu0 0.0
    %411 = vmatpush1.msra.mxu0 0.0
    %412 = vmatprep.subr.mxu0 0.0
    %413 = vmatpush1.msra.mxu0 0.0
    %414 = vmatprep.subr.mxu0 0.0
    %415 = vmatpush1.msra.mxu0 0.0
    %416 = vmatprep.subr.mxu0 0.0
    %417 = vmatpush1.msra.mxu0 0.0
    %418 = vmatprep.subr.mxu0 0.0
    %419 = vmatpush1.msra.mxu0 0.0
    %420 = vmatprep.subr.mxu0 0.0
    %421 = vmatpush1.msra.mxu0 0.0
    %422 = vmatprep.subr.mxu0 0.0
    %423 = vmatpush1.msra.mxu0 0.0
    %424 = vmatprep.subr.mxu0 0.0
    %425 = vmatpush1.msra.mxu0 0.0
    %426 = vmatprep.subr.mxu0 0.0
    %427 = vmatpush1.msra.mxu0 0.0
    %428 = vmatprep.subr.mxu0 0.0
    %429 = vmatpush1.msra.mxu0 0.0
    %430 = vmatprep.subr.mxu0 0.0
    %431 = vmatpush1.msra.mxu0 0.0
    %432 = vmatprep.subr.mxu0 0.0
    %433 = vmatpush1.msra.mxu0 0.0
    %434 = vmatprep.subr.mxu0 0.0
    %435 = vmatpush1.msra.mxu0 0.0
    %436 = vmatprep.subr.mxu0 0.0
    %437 = vmatpush1.msra.mxu0 0.0
    %438 = vmatprep.subr.mxu0 0.0
    %439 = vmatpush1.msra.mxu0 0.0
    %440 = vmatprep.subr.mxu0 0.0
    %441 = vmatpush1.msra.mxu0 0.0
    %442 = vmatprep.subr.mxu0 0.0
    %443 = vmatpush1.msra.mxu0 0.0
    %444 = vmatprep.subr.mxu0 0.0
    %445 = vmatpush1.msra.mxu0 0.0
    %446 = vmatprep.subr.mxu0 0.0
    %447 = vmatpush1.msra.mxu0 0.0
    %448 = vmatprep.subr.mxu0 0.0
    %449 = vmatpush1.msra.mxu0 0.0
    %450 = vmatprep.subr.mxu0 0.0
    %451 = vmatpush1.msra.mxu0 0.0
    %452 = vmatprep.subr.mxu0 0.0
    %453 = vmatpush1.msra.mxu0 0.0
    %454 = vmatprep.subr.mxu0 0.0
    %455 = vmatpush1.msra.mxu0 0.0
    %456 = vmatprep.subr.mxu0 0.0
    %457 = vmatpush1.msra.mxu0 0.0
    %458 = vmatprep.subr.mxu0 0.0
    %459 = vmatpush1.msra.mxu0 0.0
    %460 = vmatprep.subr.mxu0 0.0
    %461 = vmatpush1.msra.mxu0 0.0
    %462 = vmatprep.subr.mxu0 0.0
    %463 = vmatpush1.msra.mxu0 0.0
    %464 = vmatprep.mubr.f32.mxu0 0.0
    %465 = vmatmul.mubr.f32.gmra.mrb[0].mxu0 %v398
    %v466 = vpop.f32.mrb[0].mxu0
    %v467 = vadd.f32 %v395, %v466
    %v468 = vpop.f32.mrb[0].mxu0
    %469 = vdwg.mxu0
    %v470 = vsel %vm264, %v467, 0.0
    %471 = vadd.xlane.f32.xlu0 %v470
    %v472 = vpop.xlane.xlu0 %471
    %v473 = vrot.slane %v472, 4
    %v474 = vadd.f32 %v472, %v473
    %v475 = vrot.slane %v474, 2
    %v476 = vadd.f32 %v474, %v475
    %v477 = vrot.slane %v476, 1
    %v478 = vadd.f32 %v476, %v477
    %s479 = vtos %v478
    %v480 = vrcp.pop 4.0
    %s481 = vtos %v480
    %s482 = smul.f32 %s479, %s481
    %v483 = vstv %s482
    %v484 = vsub.f32 %v467, %v483
    %v485 = vmul.f32 %v484, %v484
    %v486 = vsel %vm264, %v485, 0.0
    %487 = vadd.xlane.f32.xlu0 %v486
    %v488 = vpop.xlane.xlu0 %487
    %v489 = vrot.slane %v488, 4
    %v490 = vadd.f32 %v488, %v489
    %v491 = vrot.slane %v490, 2
    %v492 = vadd.f32 %v490, %v491
    %v493 = vrot.slane %v492, 1
    %v494 = vadd.f32 %v492, %v493
    %s495 = vtos %v494
    %v496 = vrcp.pop 4.0
    %s497 = vtos %v496
    %s498 = smul.f32 %s495, %s497
    %s499 = sadd.f32 %s498, 1e-05
    %v500 = vstv %s499
    %v501 = vrsqrt.pop %v500
    %s502 = vtos %v501
    %v503 = vstv %s502
    %v504 = vmul.f32 %v484, %v503
    %505 = vrot.lane.b32.xlu0 %v50, 124
    %v506 = vpop.permute.xlu0 %505
    %v508 = vmul.f32 %v504, %v506
    %509 = vrot.lane.b32.xlu0 %v50, 123
    %v510 = vpop.permute.xlu0 %509
    %v512 = vadd.f32 %v508, %v510
    %vm513 = vcmp.ge.f32.partialorder %v512, 0.0
    %v514 = vstv %s47
    %v515 = vmul.f32 %v514, %v512
    %v516 = vsel %vm513, %v512, %v515
    %517 = vrot.lane.b32.xlu0 %v49, 125
    %v518 = vpop.permute.xlu0 %517
    %v521 = vsel %vm316, %v55, 0
    %v524 = vsel %vm320, %v516, 0
    %526 = vmatprep.subr.mxu0 0.0
    %527 = vmatpush1.msra.mxu0 %v524
    %528 = vmatprep.subr.mxu0 0.0
    %529 = vmatpush1.msra.mxu0 0.0
    %530 = vmatprep.subr.mxu0 0.0
    %531 = vmatpush1.msra.mxu0 0.0
    %532 = vmatprep.subr.mxu0 0.0
    %533 = vmatpush1.msra.mxu0 0.0
    %534 = vmatprep.subr.mxu0 0.0
    %535 = vmatpush1.msra.mxu0 0.0
    %536 = vmatprep.subr.mxu0 0.0
    %537 = vmatpush1.msra.mxu0 0.0
    %538 = vmatprep.subr.mxu0 0.0
    %539 = vmatpush1.msra.mxu0 0.0
    %540 = vmatprep.subr.mxu0 0.0
    %541 = vmatpush1.msra.mxu0 0.0
    %542 = vmatprep.subr.mxu0 0.0
    %543 = vmatpush1.msra.mxu0 0.0
    %544 = vmatprep.subr.mxu0 0.0
    %545 = vmatpush1.msra.mxu0 0.0
    %546 = vmatprep.subr.mxu0 0.0
    %547 = vmatpush1.msra.mxu0 0.0
    %548 = vmatprep.subr.mxu0 0.0
    %549 = vmatpush1.msra.mxu0 0.0
    %550 = vmatprep.subr.mxu0 0.0
    %551 = vmatpush1.msra.mxu0 0.0
    %552 = vmatprep.subr.mxu0 0.0
    %553 = vmatpush1.msra.mxu0 0.0
    %554 = vmatprep.subr.mxu0 0.0
    %555 = vmatpush1.msra.mxu0 0.0
    %556 = vmatprep.subr.mxu0 0.0
    %557 = vmatpush1.msra.mxu0 0.0
    %558 = vmatprep.subr.mxu0 0.0
    %559 = vmatpush1.msra.mxu0 0.0
    %560 = vmatprep.subr.mxu0 0.0
    %561 = vmatpush1.msra.mxu0 0.0
    %562 = vmatprep.subr.mxu0 0.0
    %563 = vmatpush1.msra.mxu0 0.0
    %564 = vmatprep.subr.mxu0 0.0
    %565 = vmatpush1.msra.mxu0 0.0
    %566 = vmatprep.subr.mxu0 0.0
    %567 = vmatpush1.msra.mxu0 0.0
    %568 = vmatprep.subr.mxu0 0.0
    %569 = vmatpush1.msra.mxu0 0.0
    %570 = vmatprep.subr.mxu0 0.0
    %571 = vmatpush1.msra.mxu0 0.0
    %572 = vmatprep.subr.mxu0 0.0
    %573 = vmatpush1.msra.mxu0 0.0
    %574 = vmatprep.subr.mxu0 0.0
    %575 = vmatpush1.msra.mxu0 0.0
    %576 = vmatprep.subr.mxu0 0.0
    %577 = vmatpush1.msra.mxu0 0.0
    %578 = vmatprep.subr.mxu0 0.0
    %579 = vmatpush1.msra.mxu0 0.0
    %580 = vmatprep.subr.mxu0 0.0
    %581 = vmatpush1.msra.mxu0 0.0
    %582 = vmatprep.subr.mxu0 0.0
    %583 = vmatpush1.msra.mxu0 0.0
    %584 = vmatprep.subr.mxu0 0.0
    %585 = vmatpush1.msra.mxu0 0.0
    %586 = vmatprep.subr.mxu0 0.0
    %587 = vmatpush1.msra.mxu0 0.0
    %588 = vmatprep.subr.mxu0 0.0
    %589 = vmatpush1.msra.mxu0 0.0
    %590 = vmatprep.mubr.f32.mxu0 0.0
    %591 = vmatmul.mubr.f32.gmra.mrb[0].mxu0 %v521
    %v592 = vpop.f32.mrb[0].mxu0
    %v593 = vadd.f32 %v518, %v592
    %v594 = vpop.f32.mrb[0].mxu0
    %595 = vdwg.mxu0
    %v596 = vxor.u32 %v391, 2147483648
    %v597 = vmul.f32 %v596, 1.442695
    %v598 = vpow.pop %v597
    %v599 = vadd.f32 %v598, 1.0
    %v600 = vrcp.pop %v599
    %v601 = vmul.f32 1.0, %v600
    %603 = vset.pattern.permute.xlu0 0
    %604 = vperm.xlu0 %603, %v601
    %v605 = vpop.permute.xlu0 %604
    %v607 = vmul.f32 %v56, %v605
    %v608 = vmul.f32 %v57, %v605
    %610 = vset.pattern.permute.xlu0 0
    %611 = vperm.xlu0 %610, %v593
    %v612 = vpop.permute.xlu0 %611
    %v614 = vadd.f32 %v607, %v612
    %v615 = vadd.f32 %v608, %v612
    %616 = vst [vmem:[%s9] sm:$0xff] %v614
    %617 = vst [vmem:[%s9 + $0x8] sm:$0xff] %v615
    %s618 = scalar_lea.vmem %s1, 16
    %v619 = vld [vmem:[%s618] sm:$0xff]
    %v620 = vld [vmem:[%s618 + $0x8] sm:$0xff]
    %v621 = vmul.f32 %v619, %v61
    %v622 = vmul.f32 %v620, %v61
    %v623 = vadd.f32 %v621, %v67
    %v624 = vadd.f32 %v622, %v67
    %vm625 = vcmp.ge.f32.partialorder %v623, 0.0
    %vm626 = vcmp.ge.f32.partialorder %v624, 0.0
    %v627 = vmul.f32 %v73, %v623
    %v628 = vmul.f32 %v73, %v624
    %v629 = vsel %vm625, %v623, %v627
    %v630 = vsel %vm626, %v624, %v628
    %631 = vmatprep.subr.mxu0 %v620
    %632 = vmatpush1.msra.mxu0 %v619
    %633 = vmatprep.subr.mxu0 0.0
    %634 = vmatpush1.msra.mxu0 0.0
    %635 = vmatprep.subr.mxu0 0.0
    %636 = vmatpush1.msra.mxu0 0.0
    %637 = vmatprep.subr.mxu0 0.0
    %638 = vmatpush1.msra.mxu0 0.0
    %639 = vmatprep.subr.mxu0 0.0
    %640 = vmatpush1.msra.mxu0 0.0
    %641 = vmatprep.subr.mxu0 0.0
    %642 = vmatpush1.msra.mxu0 0.0
    %643 = vmatprep.subr.mxu0 0.0
    %644 = vmatpush1.msra.mxu0 0.0
    %645 = vmatprep.subr.mxu0 0.0
    %646 = vmatpush1.msra.mxu0 0.0
    %647 = vmatprep.subr.mxu0 0.0
    %648 = vmatpush1.msra.mxu0 0.0
    %649 = vmatprep.subr.mxu0 0.0
    %650 = vmatpush1.msra.mxu0 0.0
    %651 = vmatprep.subr.mxu0 0.0
    %652 = vmatpush1.msra.mxu0 0.0
    %653 = vmatprep.subr.mxu0 0.0
    %654 = vmatpush1.msra.mxu0 0.0
    %655 = vmatprep.subr.mxu0 0.0
    %656 = vmatpush1.msra.mxu0 0.0
    %657 = vmatprep.subr.mxu0 0.0
    %658 = vmatpush1.msra.mxu0 0.0
    %659 = vmatprep.subr.mxu0 0.0
    %660 = vmatpush1.msra.mxu0 0.0
    %661 = vmatprep.subr.mxu0 0.0
    %662 = vmatpush1.msra.mxu0 0.0
    %663 = vmatprep.subr.mxu0 0.0
    %664 = vmatpush1.msra.mxu0 0.0
    %665 = vmatprep.subr.mxu0 0.0
    %666 = vmatpush1.msra.mxu0 0.0
    %667 = vmatprep.subr.mxu0 0.0
    %668 = vmatpush1.msra.mxu0 0.0
    %669 = vmatprep.subr.mxu0 0.0
    %670 = vmatpush1.msra.mxu0 0.0
    %671 = vmatprep.subr.mxu0 0.0
    %672 = vmatpush1.msra.mxu0 0.0
    %673 = vmatprep.subr.mxu0 0.0
    %674 = vmatpush1.msra.mxu0 0.0
    %675 = vmatprep.subr.mxu0 0.0
    %676 = vmatpush1.msra.mxu0 0.0
    %677 = vmatprep.subr.mxu0 0.0
    %678 = vmatpush1.msra.mxu0 0.0
    %679 = vmatprep.subr.mxu0 0.0
    %680 = vmatpush1.msra.mxu0 0.0
    %681 = vmatprep.subr.mxu0 0.0
    %682 = vmatpush1.msra.mxu0 0.0
    %683 = vmatprep.subr.mxu0 0.0
    %684 = vmatpush1.msra.mxu0 0.0
    %685 = vmatprep.subr.mxu0 0.0
    %686 = vmatpush1.msra.mxu0 0.0
    %687 = vmatprep.subr.mxu0 0.0
    %688 = vmatpush1.msra.mxu0 0.0
    %689 = vmatprep.subr.mxu0 0.0
    %690 = vmatpush1.msra.mxu0 0.0
    %691 = vmatprep.subr.mxu0 0.0
    %692 = vmatpush1.msra.mxu0 0.0
    %693 = vmatprep.subr.mxu0 0.0
    %694 = vmatpush1.msra.mxu0 0.0
    %695 = vmatprep.mubr.f32.mxu0 0.0
    %696 = vmatmul.mubr.f32.gmra.mrb[0].mxu0 %v81
    %v697 = vpop.f32.mrb[0].mxu0
    %v698 = vadd.f32 %v78, %v697
    %v699 = vpop.f32.mrb[0].mxu0
    %v700 = vadd.f32 %v78, %v699
    %701 = vdwg.mxu0
    %v702 = vsel %vm154, %v698, -inf
    %v703 = vsel %vm154, %v700, -inf
    %v704 = vmax.f32 %v702, %v703
    %705 = vmax.xlane.f32.xlu0 %v704
    %v706 = vpop.xlane.xlu0 %705
    %v707 = vsub.f32 %v698, %v706
    %v708 = vsub.f32 %v700, %v706
    %v709 = vmul.f32 %v707, 1.442695
    %v710 = vpow.pop %v709
    %v711 = vmul.f32 %v708, 1.442695
    %v712 = vpow.pop %v711
    %v713 = vsel %vm154, %v710, 0.0
    %v714 = vsel %vm154, %v712, 0.0
    %v715 = vadd.f32 %v713, %v714
    %716 = vadd.xlane.f32.xlu0 %v715
    %v717 = vpop.xlane.xlu0 %716
    %v718 = vrcp.pop %v717
    %v719 = vmul.f32 1.0, %v718
    %v720 = vlaneseq
    %v721 = vshrl.u32 %v720, 7
    %v722 = vsub.s32 0, %v721
    %v723 = vrot.slane %v710, %v722
    %v724 = vlaneseq
    %v725 = vshrl.u32 %v724, 7
    %v726 = vsub.s32 0, %v725
    %v727 = vrot.slane %v712, %v726
    %v728 = vmul.f32 %v629, %v723
    %v729 = vmul.f32 %v630, %v727
    %v730 = vadd.f32 %v728, %v729
    %731 = vadd.xlane.f32.xlu0 %v730
    %v732 = vpop.xlane.xlu0 %731
    %v733 = vlaneseq
    %v734 = vshrl.u32 %v733, 7
    %v735 = vsub.s32 0, %v734
    %v736 = vrot.slane %v719, %v735
    %v737 = vmul.f32 %v732, %v736
    %738 = vmatprep.subr.mxu0 0.0
    %739 = vmatpush1.msra.mxu0 %v737
    %740 = vmatprep.subr.mxu0 0.0
    %741 = vmatpush1.msra.mxu0 0.0
    %742 = vmatprep.subr.mxu0 0.0
    %743 = vmatpush1.msra.mxu0 0.0
    %744 = vmatprep.subr.mxu0 0.0
    %745 = vmatpush1.msra.mxu0 0.0
    %746 = vmatprep.subr.mxu0 0.0
    %747 = vmatpush1.msra.mxu0 0.0
    %748 = vmatprep.subr.mxu0 0.0
    %749 = vmatpush1.msra.mxu0 0.0
    %750 = vmatprep.subr.mxu0 0.0
    %751 = vmatpush1.msra.mxu0 0.0
    %752 = vmatprep.subr.mxu0 0.0
    %753 = vmatpush1.msra.mxu0 0.0
    %754 = vmatprep.subr.mxu0 0.0
    %755 = vmatpush1.msra.mxu0 0.0
    %756 = vmatprep.subr.mxu0 0.0
    %757 = vmatpush1.msra.mxu0 0.0
    %758 = vmatprep.subr.mxu0 0.0
    %759 = vmatpush1.msra.mxu0 0.0
    %760 = vmatprep.subr.mxu0 0.0
    %761 = vmatpush1.msra.mxu0 0.0
    %762 = vmatprep.subr.mxu0 0.0
    %763 = vmatpush1.msra.mxu0 0.0
    %764 = vmatprep.subr.mxu0 0.0
    %765 = vmatpush1.msra.mxu0 0.0
    %766 = vmatprep.subr.mxu0 0.0
    %767 = vmatpush1.msra.mxu0 0.0
    %768 = vmatprep.subr.mxu0 0.0
    %769 = vmatpush1.msra.mxu0 0.0
    %770 = vmatprep.subr.mxu0 0.0
    %771 = vmatpush1.msra.mxu0 0.0
    %772 = vmatprep.subr.mxu0 0.0
    %773 = vmatpush1.msra.mxu0 0.0
    %774 = vmatprep.subr.mxu0 0.0
    %775 = vmatpush1.msra.mxu0 0.0
    %776 = vmatprep.subr.mxu0 0.0
    %777 = vmatpush1.msra.mxu0 0.0
    %778 = vmatprep.subr.mxu0 0.0
    %779 = vmatpush1.msra.mxu0 0.0
    %780 = vmatprep.subr.mxu0 0.0
    %781 = vmatpush1.msra.mxu0 0.0
    %782 = vmatprep.subr.mxu0 0.0
    %783 = vmatpush1.msra.mxu0 0.0
    %784 = vmatprep.subr.mxu0 0.0
    %785 = vmatpush1.msra.mxu0 0.0
    %786 = vmatprep.subr.mxu0 0.0
    %787 = vmatpush1.msra.mxu0 0.0
    %788 = vmatprep.subr.mxu0 0.0
    %789 = vmatpush1.msra.mxu0 0.0
    %790 = vmatprep.subr.mxu0 0.0
    %791 = vmatpush1.msra.mxu0 0.0
    %792 = vmatprep.subr.mxu0 0.0
    %793 = vmatpush1.msra.mxu0 0.0
    %794 = vmatprep.subr.mxu0 0.0
    %795 = vmatpush1.msra.mxu0 0.0
    %796 = vmatprep.subr.mxu0 0.0
    %797 = vmatpush1.msra.mxu0 0.0
    %798 = vmatprep.subr.mxu0 0.0
    %799 = vmatpush1.msra.mxu0 0.0
    %800 = vmatprep.subr.mxu0 0.0
    %801 = vmatpush1.msra.mxu0 0.0
    %802 = vmatprep.mubr.f32.mxu0 0.0
    %803 = vmatmul.mubr.f32.gmra.mrb[0].mxu0 %v192
    %v804 = vpop.f32.mrb[0].mxu0
    %v805 = vadd.f32 %v50, %v804
    %v806 = vpop.f32.mrb[0].mxu0
    %807 = vdwg.mxu0
    %v808 = vsel %vm264, %v805, 0.0
    %809 = vadd.xlane.f32.xlu0 %v808
    %v810 = vpop.xlane.xlu0 %809
    %v811 = vrot.slane %v810, 4
    %v812 = vadd.f32 %v810, %v811
    %v813 = vrot.slane %v812, 2
    %v814 = vadd.f32 %v812, %v813
    %v815 = vrot.slane %v814, 1
    %v816 = vadd.f32 %v814, %v815
    %s817 = vtos %v816
    %v818 = vrcp.pop 4.0
    %s819 = vtos %v818
    %s820 = smul.f32 %s817, %s819
    %v821 = vstv %s820
    %v822 = vsub.f32 %v805, %v821
    %v823 = vmul.f32 %v822, %v822
    %v824 = vsel %vm264, %v823, 0.0
    %825 = vadd.xlane.f32.xlu0 %v824
    %v826 = vpop.xlane.xlu0 %825
    %v827 = vrot.slane %v826, 4
    %v828 = vadd.f32 %v826, %v827
    %v829 = vrot.slane %v828, 2
    %v830 = vadd.f32 %v828, %v829
    %v831 = vrot.slane %v830, 1
    %v832 = vadd.f32 %v830, %v831
    %s833 = vtos %v832
    %v834 = vrcp.pop 4.0
    %s835 = vtos %v834
    %s836 = smul.f32 %s833, %s835
    %s837 = sadd.f32 %s836, 1e-05
    %v838 = vstv %s837
    %v839 = vrsqrt.pop %v838
    %s840 = vtos %v839
    %v841 = vstv %s840
    %v842 = vmul.f32 %v822, %v841
    %v843 = vmul.f32 %v842, %v302
    %v844 = vadd.f32 %v843, %v306
    %vm845 = vcmp.ge.f32.partialorder %v844, 0.0
    %v846 = vmul.f32 %v310, %v844
    %v847 = vsel %vm845, %v844, %v846
    %v849 = vsel %vm320, %v847, 0
    %851 = vmatprep.subr.mxu0 0.0
    %852 = vmatpush1.msra.mxu0 %v849
    %853 = vmatprep.subr.mxu0 0.0
    %854 = vmatpush1.msra.mxu0 0.0
    %855 = vmatprep.subr.mxu0 0.0
    %856 = vmatpush1.msra.mxu0 0.0
    %857 = vmatprep.subr.mxu0 0.0
    %858 = vmatpush1.msra.mxu0 0.0
    %859 = vmatprep.subr.mxu0 0.0
    %860 = vmatpush1.msra.mxu0 0.0
    %861 = vmatprep.subr.mxu0 0.0
    %862 = vmatpush1.msra.mxu0 0.0
    %863 = vmatprep.subr.mxu0 0.0
    %864 = vmatpush1.msra.mxu0 0.0
    %865 = vmatprep.subr.mxu0 0.0
    %866 = vmatpush1.msra.mxu0 0.0
    %867 = vmatprep.subr.mxu0 0.0
    %868 = vmatpush1.msra.mxu0 0.0
    %869 = vmatprep.subr.mxu0 0.0
    %870 = vmatpush1.msra.mxu0 0.0
    %871 = vmatprep.subr.mxu0 0.0
    %872 = vmatpush1.msra.mxu0 0.0
    %873 = vmatprep.subr.mxu0 0.0
    %874 = vmatpush1.msra.mxu0 0.0
    %875 = vmatprep.subr.mxu0 0.0
    %876 = vmatpush1.msra.mxu0 0.0
    %877 = vmatprep.subr.mxu0 0.0
    %878 = vmatpush1.msra.mxu0 0.0
    %879 = vmatprep.subr.mxu0 0.0
    %880 = vmatpush1.msra.mxu0 0.0
    %881 = vmatprep.subr.mxu0 0.0
    %882 = vmatpush1.msra.mxu0 0.0
    %883 = vmatprep.subr.mxu0 0.0
    %884 = vmatpush1.msra.mxu0 0.0
    %885 = vmatprep.subr.mxu0 0.0
    %886 = vmatpush1.msra.mxu0 0.0
    %887 = vmatprep.subr.mxu0 0.0
    %888 = vmatpush1.msra.mxu0 0.0
    %889 = vmatprep.subr.mxu0 0.0
    %890 = vmatpush1.msra.mxu0 0.0
    %891 = vmatprep.subr.mxu0 0.0
    %892 = vmatpush1.msra.mxu0 0.0
    %893 = vmatprep.subr.mxu0 0.0
    %894 = vmatpush1.msra.mxu0 0.0
    %895 = vmatprep.subr.mxu0 0.0
    %896 = vmatpush1.msra.mxu0 0.0
    %897 = vmatprep.subr.mxu0 0.0
    %898 = vmatpush1.msra.mxu0 0.0
    %899 = vmatprep.subr.mxu0 0.0
    %900 = vmatpush1.msra.mxu0 0.0
    %901 = vmatprep.subr.mxu0 0.0
    %902 = vmatpush1.msra.mxu0 0.0
    %903 = vmatprep.subr.mxu0 0.0
    %904 = vmatpush1.msra.mxu0 0.0
    %905 = vmatprep.subr.mxu0 0.0
    %906 = vmatpush1.msra.mxu0 0.0
    %907 = vmatprep.subr.mxu0 0.0
    %908 = vmatpush1.msra.mxu0 0.0
    %909 = vmatprep.subr.mxu0 0.0
    %910 = vmatpush1.msra.mxu0 0.0
    %911 = vmatprep.subr.mxu0 0.0
    %912 = vmatpush1.msra.mxu0 0.0
    %913 = vmatprep.subr.mxu0 0.0
    %914 = vmatpush1.msra.mxu0 0.0
    %915 = vmatprep.mubr.f32.mxu0 0.0
    %916 = vmatmul.mubr.f32.gmra.mrb[0].mxu0 %v318
    %v917 = vpop.f32.mrb[0].mxu0
    %v918 = vadd.f32 %v314, %v917
    %v919 = vpop.f32.mrb[0].mxu0
    %920 = vdwg.mxu0
    %921 = vmatprep.subr.mxu0 0.0
    %922 = vmatpush1.msra.mxu0 %v737
    %923 = vmatprep.subr.mxu0 0.0
    %924 = vmatpush1.msra.mxu0 0.0
    %925 = vmatprep.subr.mxu0 0.0
    %926 = vmatpush1.msra.mxu0 0.0
    %927 = vmatprep.subr.mxu0 0.0
    %928 = vmatpush1.msra.mxu0 0.0
    %929 = vmatprep.subr.mxu0 0.0
    %930 = vmatpush1.msra.mxu0 0.0
    %931 = vmatprep.subr.mxu0 0.0
    %932 = vmatpush1.msra.mxu0 0.0
    %933 = vmatprep.subr.mxu0 0.0
    %934 = vmatpush1.msra.mxu0 0.0
    %935 = vmatprep.subr.mxu0 0.0
    %936 = vmatpush1.msra.mxu0 0.0
    %937 = vmatprep.subr.mxu0 0.0
    %938 = vmatpush1.msra.mxu0 0.0
    %939 = vmatprep.subr.mxu0 0.0
    %940 = vmatpush1.msra.mxu0 0.0
    %941 = vmatprep.subr.mxu0 0.0
    %942 = vmatpush1.msra.mxu0 0.0
    %943 = vmatprep.subr.mxu0 0.0
    %944 = vmatpush1.msra.mxu0 0.0
    %945 = vmatprep.subr.mxu0 0.0
    %946 = vmatpush1.msra.mxu0 0.0
    %947 = vmatprep.subr.mxu0 0.0
    %948 = vmatpush1.msra.mxu0 0.0
    %949 = vmatprep.subr.mxu0 0.0
    %950 = vmatpush1.msra.mxu0 0.0
    %951 = vmatprep.subr.mxu0 0.0
    %952 = vmatpush1.msra.mxu0 0.0
    %953 = vmatprep.subr.mxu0 0.0
    %954 = vmatpush1.msra.mxu0 0.0
    %955 = vmatprep.subr.mxu0 0.0
    %956 = vmatpush1.msra.mxu0 0.0
    %957 = vmatprep.subr.mxu0 0.0
    %958 = vmatpush1.msra.mxu0 0.0
    %959 = vmatprep.subr.mxu0 0.0
    %960 = vmatpush1.msra.mxu0 0.0
    %961 = vmatprep.subr.mxu0 0.0
    %962 = vmatpush1.msra.mxu0 0.0
    %963 = vmatprep.subr.mxu0 0.0
    %964 = vmatpush1.msra.mxu0 0.0
    %965 = vmatprep.subr.mxu0 0.0
    %966 = vmatpush1.msra.mxu0 0.0
    %967 = vmatprep.subr.mxu0 0.0
    %968 = vmatpush1.msra.mxu0 0.0
    %969 = vmatprep.subr.mxu0 0.0
    %970 = vmatpush1.msra.mxu0 0.0
    %971 = vmatprep.subr.mxu0 0.0
    %972 = vmatpush1.msra.mxu0 0.0
    %973 = vmatprep.subr.mxu0 0.0
    %974 = vmatpush1.msra.mxu0 0.0
    %975 = vmatprep.subr.mxu0 0.0
    %976 = vmatpush1.msra.mxu0 0.0
    %977 = vmatprep.subr.mxu0 0.0
    %978 = vmatpush1.msra.mxu0 0.0
    %979 = vmatprep.subr.mxu0 0.0
    %980 = vmatpush1.msra.mxu0 0.0
    %981 = vmatprep.subr.mxu0 0.0
    %982 = vmatpush1.msra.mxu0 0.0
    %983 = vmatprep.subr.mxu0 0.0
    %984 = vmatpush1.msra.mxu0 0.0
    %985 = vmatprep.mubr.f32.mxu0 0.0
    %986 = vmatmul.mubr.f32.gmra.mrb[0].mxu0 %v398
    %v987 = vpop.f32.mrb[0].mxu0
    %v988 = vadd.f32 %v395, %v987
    %v989 = vpop.f32.mrb[0].mxu0
    %990 = vdwg.mxu0
    %v991 = vsel %vm264, %v988, 0.0
    %992 = vadd.xlane.f32.xlu0 %v991
    %v993 = vpop.xlane.xlu0 %992
    %v994 = vrot.slane %v993, 4
    %v995 = vadd.f32 %v993, %v994
    %v996 = vrot.slane %v995, 2
    %v997 = vadd.f32 %v995, %v996
    %v998 = vrot.slane %v997, 1
    %v999 = vadd.f32 %v997, %v998
    %s1000 = vtos %v999
    %v1001 = vrcp.pop 4.0
    %s1002 = vtos %v1001
    %s1003 = smul.f32 %s1000, %s1002
    %v1004 = vstv %s1003
    %v1005 = vsub.f32 %v988, %v1004
    %v1006 = vmul.f32 %v1005, %v1005
    %v1007 = vsel %vm264, %v1006, 0.0
    %1008 = vadd.xlane.f32.xlu0 %v1007
    %v1009 = vpop.xlane.xlu0 %1008
    %v1010 = vrot.slane %v1009, 4
    %v1011 = vadd.f32 %v1009, %v1010
    %v1012 = vrot.slane %v1011, 2
    %v1013 = vadd.f32 %v1011, %v1012
    %v1014 = vrot.slane %v1013, 1
    %v1015 = vadd.f32 %v1013, %v1014
    %s1016 = vtos %v1015
    %v1017 = vrcp.pop 4.0
    %s1018 = vtos %v1017
    %s1019 = smul.f32 %s1016, %s1018
    %s1020 = sadd.f32 %s1019, 1e-05
    %v1021 = vstv %s1020
    %v1022 = vrsqrt.pop %v1021
    %s1023 = vtos %v1022
    %v1024 = vstv %s1023
    %v1025 = vmul.f32 %v1005, %v1024
    %v1026 = vmul.f32 %v1025, %v506
    %v1027 = vadd.f32 %v1026, %v510
    %vm1028 = vcmp.ge.f32.partialorder %v1027, 0.0
    %v1029 = vmul.f32 %v514, %v1027
    %v1030 = vsel %vm1028, %v1027, %v1029
    %v1032 = vsel %vm320, %v1030, 0
    %1034 = vmatprep.subr.mxu0 0.0
    %1035 = vmatpush1.msra.mxu0 %v1032
    %1036 = vmatprep.subr.mxu0 0.0
    %1037 = vmatpush1.msra.mxu0 0.0
    %1038 = vmatprep.subr.mxu0 0.0
    %1039 = vmatpush1.msra.mxu0 0.0
    %1040 = vmatprep.subr.mxu0 0.0
    %1041 = vmatpush1.msra.mxu0 0.0
    %1042 = vmatprep.subr.mxu0 0.0
    %1043 = vmatpush1.msra.mxu0 0.0
    %1044 = vmatprep.subr.mxu0 0.0
    %1045 = vmatpush1.msra.mxu0 0.0
    %1046 = vmatprep.subr.mxu0 0.0
    %1047 = vmatpush1.msra.mxu0 0.0
    %1048 = vmatprep.subr.mxu0 0.0
    %1049 = vmatpush1.msra.mxu0 0.0
    %1050 = vmatprep.subr.mxu0 0.0
    %1051 = vmatpush1.msra.mxu0 0.0
    %1052 = vmatprep.subr.mxu0 0.0
    %1053 = vmatpush1.msra.mxu0 0.0
    %1054 = vmatprep.subr.mxu0 0.0
    %1055 = vmatpush1.msra.mxu0 0.0
    %1056 = vmatprep.subr.mxu0 0.0
    %1057 = vmatpush1.msra.mxu0 0.0
    %1058 = vmatprep.subr.mxu0 0.0
    %1059 = vmatpush1.msra.mxu0 0.0
    %1060 = vmatprep.subr.mxu0 0.0
    %1061 = vmatpush1.msra.mxu0 0.0
    %1062 = vmatprep.subr.mxu0 0.0
    %1063 = vmatpush1.msra.mxu0 0.0
    %1064 = vmatprep.subr.mxu0 0.0
    %1065 = vmatpush1.msra.mxu0 0.0
    %1066 = vmatprep.subr.mxu0 0.0
    %1067 = vmatpush1.msra.mxu0 0.0
    %1068 = vmatprep.subr.mxu0 0.0
    %1069 = vmatpush1.msra.mxu0 0.0
    %1070 = vmatprep.subr.mxu0 0.0
    %1071 = vmatpush1.msra.mxu0 0.0
    %1072 = vmatprep.subr.mxu0 0.0
    %1073 = vmatpush1.msra.mxu0 0.0
    %1074 = vmatprep.subr.mxu0 0.0
    %1075 = vmatpush1.msra.mxu0 0.0
    %1076 = vmatprep.subr.mxu0 0.0
    %1077 = vmatpush1.msra.mxu0 0.0
    %1078 = vmatprep.subr.mxu0 0.0
    %1079 = vmatpush1.msra.mxu0 0.0
    %1080 = vmatprep.subr.mxu0 0.0
    %1081 = vmatpush1.msra.mxu0 0.0
    %1082 = vmatprep.subr.mxu0 0.0
    %1083 = vmatpush1.msra.mxu0 0.0
    %1084 = vmatprep.subr.mxu0 0.0
    %1085 = vmatpush1.msra.mxu0 0.0
    %1086 = vmatprep.subr.mxu0 0.0
    %1087 = vmatpush1.msra.mxu0 0.0
    %1088 = vmatprep.subr.mxu0 0.0
    %1089 = vmatpush1.msra.mxu0 0.0
    %1090 = vmatprep.subr.mxu0 0.0
    %1091 = vmatpush1.msra.mxu0 0.0
    %1092 = vmatprep.subr.mxu0 0.0
    %1093 = vmatpush1.msra.mxu0 0.0
    %1094 = vmatprep.subr.mxu0 0.0
    %1095 = vmatpush1.msra.mxu0 0.0
    %1096 = vmatprep.subr.mxu0 0.0
    %1097 = vmatpush1.msra.mxu0 0.0
    %1098 = vmatprep.mubr.f32.mxu0 0.0
    %1099 = vmatmul.mubr.f32.gmra.mrb[0].mxu0 %v521
    %v1100 = vpop.f32.mrb[0].mxu0
    %v1101 = vadd.f32 %v518, %v1100
    %v1102 = vpop.f32.mrb[0].mxu0
    %1103 = vdwg.mxu0
    %v1104 = vxor.u32 %v918, 2147483648
    %v1105 = vmul.f32 %v1104, 1.442695
    %v1106 = vpow.pop %v1105
    %v1107 = vadd.f32 %v1106, 1.0
    %v1108 = vrcp.pop %v1107
    %v1109 = vmul.f32 1.0, %v1108
    %1111 = vset.pattern.permute.xlu0 0
    %1112 = vperm.xlu0 %1111, %v1109
    %v1113 = vpop.permute.xlu0 %1112
    %v1115 = vmul.f32 %v619, %v1113
    %v1116 = vmul.f32 %v620, %v1113
    %1118 = vset.pattern.permute.xlu0 0
    %1119 = vperm.xlu0 %1118, %v1101
    %v1120 = vpop.permute.xlu0 %1119
    %v1122 = vadd.f32 %v1115, %v1120
    %v1123 = vadd.f32 %v1116, %v1120
    %s1124 = scalar_lea.vmem %s9, 16
    %1125 = vst [vmem:[%s1124] sm:$0xff] %v1122
    %1126 = vst [vmem:[%s1124 + $0x8] sm:$0xff] %v1123
    // Predicated region
    $region42: #{context_block_2d.1} parent=1 // pred_check
      _
    $region43: #{context_block_2d.1} parent=1 // pred_check_branch
      %1128 = sbr.rel (0) target = $region45
    $region44: #{context_block_2d.1} parent=1 // pred_region
      _
    $region45: #{context_block_2d.1} parent=1 // pred_fallthru
      _
    // Predicated region
    $region46: #{context_block_2d.1} parent=1 // pred_check
      _
    $region47: #{context_block_2d.1} parent=1 // pred_check_branch
      %1130 = sbr.rel (0) target = $region49
    $region48: #{context_block_2d.1} parent=1 // pred_region
      _
    $region49: #{context_block_2d.1} parent=1 // pred_fallthru
      _
    %1131 = vsyncpa [#allocation3], 1

</llo_original>
